<compile_context>
chip_gen: v7x
topology: tpu7x:2x2x1
jax: 0.10.0
libtpu: 0.0.40
codegen_flags: <defaults>
</compile_context>

<pallas_src>
import functools
import math

import jax
import jax.numpy as jnp
from jax import lax
from jax.experimental import pallas as pl
from jax.experimental.pallas import tpu as pltpu


# ----------------------------- kernel helpers -------------------------------

def _layernorm(x, g, b, eps=1e-5):
    # x: (M, D) fp32, g/b: (1, D) fp32
    mu = jnp.mean(x, axis=-1, keepdims=True)
    var = jnp.mean((x - mu) ** 2, axis=-1, keepdims=True)
    return (x - mu) * lax.rsqrt(var + eps) * g + b


# ------------------------ residual attention block --------------------------

def _resblock_kernel(n_heads,
                     x_ref,
                     ln1g, ln1b,
                     wqkv, bqkv, wo, bo,
                     ln2g, ln2b,
                     wfc, bfc, wpr, bpr,
                     o_ref):
    # x_ref block: (TB, S, D) bf16
    TB, S, D = x_ref.shape
    H = n_heads
    hd = D // H
    scale = 1.0 / math.sqrt(hd)

    x = x_ref[...].astype(jnp.float32)                     # (TB, S, D)
    xf = x.reshape(TB * S, D)                              # flatten rows for MXU

    # --- pre-LN + multi-head causal self-attention ---
    xn = _layernorm(xf, ln1g[...], ln1b[...]).astype(jnp.bfloat16)

    # packed QKV projection: one full-width matmul
    qkv = jnp.dot(xn, wqkv[...],
                  preferred_element_type=jnp.float32) + bqkv[...]   # (TB*S, 3D) f32
    q = qkv[:, 0 * D:1 * D] * scale     # pre-scale q (matches torch MHA)
    k = qkv[:, 1 * D:2 * D]
    v = qkv[:, 2 * D:3 * D]

    # additive causal bias, broadcast over batch rows and heads
    row = lax.broadcasted_iota(jnp.int32, (1, S, S), 1)
    col = lax.broadcasted_iota(jnp.int32, (1, S, S), 2)
    mask_bias = jnp.where(col <= row, 0.0, -1e30).astype(jnp.float32)

    heads_out = []
    for h in range(H):                                     # unrolled head loop
        qh = q[:, h * hd:(h + 1) * hd].reshape(TB, S, hd).astype(jnp.bfloat16)
        kh = k[:, h * hd:(h + 1) * hd].reshape(TB, S, hd).astype(jnp.bfloat16)
        vh = v[:, h * hd:(h + 1) * hd].reshape(TB, S, hd).astype(jnp.bfloat16)
        sc = jnp.einsum('bqd,bkd->bqk', qh, kh,
                        preferred_element_type=jnp.float32)         # (TB, S, S)
        sc = sc + mask_bias
        sc = sc - jnp.max(sc, axis=-1, keepdims=True)
        p = jnp.exp(sc)
        p = p * pl.reciprocal(jnp.sum(p, axis=-1, keepdims=True), approx=True)
        oh = jnp.einsum('bqk,bkd->bqd', p.astype(jnp.bfloat16), vh,
                        preferred_element_type=jnp.float32)          # (TB, S, hd)
        heads_out.append(oh.reshape(TB * S, hd))

    attn = jnp.concatenate(heads_out, axis=-1)             # (TB*S, D) f32
    attn = jnp.dot(attn.astype(jnp.bfloat16), wo[...],
                   preferred_element_type=jnp.float32) + bo[...]
    x1 = xf + attn

    # --- pre-LN + MLP (QuickGELU) ---
    xn2 = _layernorm(x1, ln2g[...], ln2b[...]).astype(jnp.bfloat16)
    hdn = jnp.dot(xn2, wfc[...],
                  preferred_element_type=jnp.float32) + bfc[...]     # (TB*S, 4D) f32
    hdn = hdn * jax.nn.sigmoid(1.702 * hdn)                # QuickGELU (fp32, EUP)
    mlp = jnp.dot(hdn.astype(jnp.bfloat16), wpr[...],
                  preferred_element_type=jnp.float32) + bpr[...]
    x2 = x1 + mlp

    o_ref[...] = x2.reshape(TB, S, D).astype(o_ref.dtype)


def _batch_tile(B, S, target_rows=512):
    """Largest divisor of B such that tb*S stays near `target_rows` MXU rows."""
    cap = max(1, target_rows // max(S, 1))
    tb = 1
    for d in range(1, B + 1):
        if B % d == 0 and d <= cap:
            tb = d
    return tb


def resblock(x, layer, n_heads):
    B, S, D = x.shape
    tb = _batch_tile(B, S)
    params = [layer['ln1_g'], layer['ln1_b'],
              layer['w_qkv'], layer['b_qkv'], layer['w_o'], layer['b_o'],
              layer['ln2_g'], layer['ln2_b'],
              layer['w_fc'], layer['b_fc'], layer['w_pr'], layer['b_pr']]

    def rep_spec(a):
        nd = a.ndim
        return pl.BlockSpec(a.shape, lambda *_: (0,) * nd)

    return pl.pallas_call(
        functools.partial(_resblock_kernel, n_heads),
        out_shape=jax.ShapeDtypeStruct((B, S, D), x.dtype),
        grid=(B // tb,),
        in_specs=[pl.BlockSpec((tb, S, D), lambda b: (b, 0, 0))]
                 + [rep_spec(a) for a in params],
        out_specs=pl.BlockSpec((tb, S, D), lambda b: (b, 0, 0)),
        compiler_params=pltpu.CompilerParams(
            dimension_semantics=("parallel",),
            vmem_limit_bytes=48 * 1024 * 1024),
    )(x, *params)


# ----------------- ln_final + text projection on gathered EOT rows ----------

def _final_kernel(x_ref, lng, lnb, proj, o_ref):
    # x_ref: (B, D) bf16 — only the gathered EOT rows reach this kernel.
    x = x_ref[...].astype(jnp.float32)
    xn = _layernorm(x, lng[...], lnb[...]).astype(jnp.bfloat16)
    o_ref[...] = jnp.dot(xn, proj[...],
                         preferred_element_type=jnp.float32).astype(o_ref.dtype)


def final_project(rows, ln_g, ln_b, proj):
    B, D = rows.shape
    P = proj.shape[1]
    return pl.pallas_call(
        _final_kernel,
        out_shape=jax.ShapeDtypeStruct((B, P), jnp.float32),
        grid=(1,),
        in_specs=[pl.BlockSpec((B, D), lambda i: (0, 0)),
                  pl.BlockSpec(ln_g.shape, lambda i: (0, 0)),
                  pl.BlockSpec(ln_b.shape, lambda i: (0, 0)),
                  pl.BlockSpec(proj.shape, lambda i: (0, 0))],
        out_specs=pl.BlockSpec((B, P), lambda i: (0, 0)),
    )(rows, ln_g, ln_b, proj)


# ------------------------------ full forward ---------------------------------

def text_encoder_forward(prompts, tokenized_prompts, compound_prompts,
                         params, n_heads):
    # prompts: (B, S, D) == PyTorch (n_cls, n_tkn, dim)
    x = (prompts + params['pos_emb'][None]).astype(jnp.bfloat16)
    B, S, D = x.shape

    # pad seq to a sublane multiple; padded keys are causally masked and padded
    # query rows never reach the EOT gather.
    S_pad = ((S + 7) // 8) * 8
    if S_pad != S:
        x = jnp.pad(x, ((0, 0), (0, S_pad - S), (0, 0)))

    n_ctx = compound_prompts[0].shape[0] if compound_prompts else 0

    for i, layer in enumerate(params['layers']):
        # MaPLe compound-prompt injection (layers 1 .. depth-1): replace tokens
        # [1, 1+n_ctx) with this layer's learned deep prompt.
        if i > 0 and (i - 1) < len(compound_prompts):
            ctx = jnp.broadcast_to(compound_prompts[i - 1][None],
                                   (B, n_ctx, D)).astype(x.dtype)
            x = lax.dynamic_update_slice(x, ctx, (0, 1, 0))
        x = resblock(x, layer, n_heads)

    # EOT gather in the wrapper (one tiny XLA gather) so the final Pallas
    # kernel only DMAs B rows instead of the full (B, S, D) tensor.
    eot_idx = jnp.argmax(tokenized_prompts, axis=-1).astype(jnp.int32)
    rows = x[jnp.arange(B), eot_idx]                        # (B, D) bf16

    return final_project(rows, params['ln_f_g'], params['ln_f_b'],
                         params['text_projection'])


# --------------------------- parameter construction --------------------------

def init_params(key, seq, dim, n_heads, n_layers, proj_dim):
    keys = jax.random.split(key, 2 + n_layers)

    def nrm(k, shape, scale=0.02, dtype=jnp.float32):
        return (scale * jax.random.normal(k, shape)).astype(dtype)

    params = {
        'pos_emb': nrm(keys[0], (seq, dim)),
        'ln_f_g': jnp.ones((1, dim), jnp.float32),
        'ln_f_b': jnp.zeros((1, dim), jnp.float32),
        'text_projection': nrm(keys[1], (dim, proj_dim), dtype=jnp.bfloat16),
        'layers': [],
    }
    for l in range(n_layers):
        lk = jax.random.split(keys[2 + l], 6)
        layer = {
            'ln1_g': jnp.ones((1, dim), jnp.float32),
            'ln1_b': jnp.zeros((1, dim), jnp.float32),
            # packed projections: w_qkv == [Wq | Wk | Wv] (each (D, D)),
            # mathematically identical to torch's in_proj_weight.T layout.
            'w_qkv': nrm(lk[0], (dim, 3 * dim), dtype=jnp.bfloat16),
            'b_qkv': nrm(lk[1], (1, 3 * dim)),
            'w_o': nrm(lk[2], (dim, dim), dtype=jnp.bfloat16),
            'b_o': jnp.zeros((1, dim), jnp.float32),
            'ln2_g': jnp.ones((1, dim), jnp.float32),
            'ln2_b': jnp.zeros((1, dim), jnp.float32),
            'w_fc': nrm(lk[3], (dim, 4 * dim), dtype=jnp.bfloat16),
            'b_fc': jnp.zeros((1, 4 * dim), jnp.float32),
            'w_pr': nrm(lk[4], (4 * dim, dim), dtype=jnp.bfloat16),
            'b_pr': jnp.zeros((1, dim), jnp.float32),
        }
        params['layers'].append(layer)
    return params


# ------------------------------------ main -----------------------------------

if __name__ == "__main__":
    B, S, D, H, L, P = 2, 8, 32, 4, 3, 16   # batch, seq, width, heads, layers, proj
    n_ctx = 2                               # compound prompt length
    # compound_prompts_deeper_text has (depth - 1) entries; depth = 2 here.
    key = jax.random.PRNGKey(0)
    k_par, k_prm, k_tok, k_cmp = jax.random.split(key, 4)

    params = init_params(k_par, S, D, H, L, P)
    prompts = (0.02 * jax.random.normal(k_prm, (B, S, D))).astype(jnp.float32)
    tokenized_prompts = jax.random.randint(k_tok, (B, S), 0, 100).astype(jnp.int32)
    compound_prompts = [
        (0.02 * jax.random.normal(k_cmp, (n_ctx, D))).astype(jnp.float32)
    ]

    out = text_encoder_forward(prompts, tokenized_prompts, compound_prompts,
                               params, H)
    out = jax.block_until_ready(out)
    assert out.shape == (B, P) and out.dtype == jnp.float32
    print("KERNEL_OK")
</pallas_src>

<mosaic_0001>
module attributes {stable_mosaic.version = 11 : i64} {
  func.func @_resblock_kernel(%arg0: i32, %arg1: memref<2x8x32xbf16, #tpu.memory_space<vmem>>, %arg2: memref<1x32xf32, #tpu.memory_space<vmem>>, %arg3: memref<1x32xf32, #tpu.memory_space<vmem>>, %arg4: memref<32x96xbf16, #tpu.memory_space<vmem>>, %arg5: memref<1x96xf32, #tpu.memory_space<vmem>>, %arg6: memref<32x32xbf16, #tpu.memory_space<vmem>>, %arg7: memref<1x32xf32, #tpu.memory_space<vmem>>, %arg8: memref<1x32xf32, #tpu.memory_space<vmem>>, %arg9: memref<1x32xf32, #tpu.memory_space<vmem>>, %arg10: memref<32x128xbf16, #tpu.memory_space<vmem>>, %arg11: memref<1x128xf32, #tpu.memory_space<vmem>>, %arg12: memref<128x32xbf16, #tpu.memory_space<vmem>>, %arg13: memref<1x32xf32, #tpu.memory_space<vmem>>, %arg14: memref<2x8x32xbf16, #tpu.memory_space<vmem>>) attributes {dimension_semantics = [#tpu.dimension_semantics<parallel>], iteration_bounds = array<i64: 1>, scalar_prefetch = 0 : i64, scratch_operands = 0 : i64, tpu.core_type = #tpu.core_type<tc>, window_params = [{transform_indices = @transform_0, window_bounds = array<i64: 2, 8, 32>}, {pipeline_mode = #tpu.pipeline_mode<synchronous>, transform_indices = @transform_1, window_bounds = array<i64: 1, 32>}, {pipeline_mode = #tpu.pipeline_mode<synchronous>, transform_indices = @transform_2, window_bounds = array<i64: 1, 32>}, {pipeline_mode = #tpu.pipeline_mode<synchronous>, transform_indices = @transform_3, window_bounds = array<i64: 32, 96>}, {pipeline_mode = #tpu.pipeline_mode<synchronous>, transform_indices = @transform_4, window_bounds = array<i64: 1, 96>}, {pipeline_mode = #tpu.pipeline_mode<synchronous>, transform_indices = @transform_5, window_bounds = array<i64: 32, 32>}, {pipeline_mode = #tpu.pipeline_mode<synchronous>, transform_indices = @transform_6, window_bounds = array<i64: 1, 32>}, {pipeline_mode = #tpu.pipeline_mode<synchronous>, transform_indices = @transform_7, window_bounds = array<i64: 1, 32>}, {pipeline_mode = #tpu.pipeline_mode<synchronous>, transform_indices = @transform_8, window_bounds = array<i64: 1, 32>}, {pipeline_mode = #tpu.pipeline_mode<synchronous>, transform_indices = @transform_9, window_bounds = array<i64: 32, 128>}, {pipeline_mode = #tpu.pipeline_mode<synchronous>, transform_indices = @transform_10, window_bounds = array<i64: 1, 128>}, {pipeline_mode = #tpu.pipeline_mode<synchronous>, transform_indices = @transform_11, window_bounds = array<i64: 128, 32>}, {pipeline_mode = #tpu.pipeline_mode<synchronous>, transform_indices = @transform_12, window_bounds = array<i64: 1, 32>}, {transform_indices = @transform_13, window_bounds = array<i64: 2, 8, 32>}]} {
    %c0 = arith.constant 0 : index
    %c0_0 = arith.constant 0 : index
    %c0_1 = arith.constant 0 : index
    %0 = vector.load %arg1[%c0, %c0_0, %c0_1] : memref<2x8x32xbf16, #tpu.memory_space<vmem>>, vector<2x8x32xbf16>
    %1 = arith.extf %0 : vector<2x8x32xbf16> to vector<2x8x32xf32>
    %2 = vector.shape_cast %1 : vector<2x8x32xf32> to vector<16x32xf32>
    %c0_2 = arith.constant 0 : index
    %c0_3 = arith.constant 0 : index
    %3 = vector.load %arg2[%c0_2, %c0_3] : memref<1x32xf32, #tpu.memory_space<vmem>>, vector<1x32xf32>
    %c0_4 = arith.constant 0 : index
    %c0_5 = arith.constant 0 : index
    %4 = vector.load %arg3[%c0_4, %c0_5] : memref<1x32xf32, #tpu.memory_space<vmem>>, vector<1x32xf32>
    %cst = arith.constant dense<0.000000e+00> : vector<16xf32>
    %5 = vector.multi_reduction <add>, %2, %cst [1] : vector<16x32xf32> to vector<16xf32>
    %6 = vector.shape_cast %5 : vector<16xf32> to vector<16x1xf32>
    %cst_6 = arith.constant 3.200000e+01 : f32
    %7 = vector.broadcast %cst_6 : f32 to vector<16x1xf32>
    %8 = arith.divf %6, %7 : vector<16x1xf32>
    %9 = vector.broadcast %8 : vector<16x1xf32> to vector<16x32xf32>
    %10 = arith.subf %2, %9 : vector<16x32xf32>
    %11 = arith.mulf %10, %10 : vector<16x32xf32>
    %cst_7 = arith.constant dense<0.000000e+00> : vector<16xf32>
    %12 = vector.multi_reduction <add>, %11, %cst_7 [1] : vector<16x32xf32> to vector<16xf32>
    %13 = vector.shape_cast %12 : vector<16xf32> to vector<16x1xf32>
    %cst_8 = arith.constant 3.200000e+01 : f32
    %14 = vector.broadcast %cst_8 : f32 to vector<16x1xf32>
    %15 = arith.divf %13, %14 : vector<16x1xf32>
    %16 = vector.broadcast %8 : vector<16x1xf32> to vector<16x32xf32>
    %17 = arith.subf %2, %16 : vector<16x32xf32>
    %cst_9 = arith.constant 9.99999974E-6 : f32
    %18 = vector.broadcast %cst_9 : f32 to vector<16x1xf32>
    %19 = arith.addf %15, %18 : vector<16x1xf32>
    %20 = math.rsqrt %19 : vector<16x1xf32>
    %21 = vector.broadcast %20 : vector<16x1xf32> to vector<16x32xf32>
    %22 = arith.mulf %17, %21 : vector<16x32xf32>
    %23 = vector.broadcast %3 : vector<1x32xf32> to vector<16x32xf32>
    %24 = arith.mulf %22, %23 : vector<16x32xf32>
    %25 = vector.broadcast %4 : vector<1x32xf32> to vector<16x32xf32>
    %26 = arith.addf %24, %25 : vector<16x32xf32>
    %27 = arith.truncf %26 : vector<16x32xf32> to vector<16x32xbf16>
    %c0_10 = arith.constant 0 : index
    %c0_11 = arith.constant 0 : index
    %28 = vector.load %arg4[%c0_10, %c0_11] : memref<32x96xbf16, #tpu.memory_space<vmem>>, vector<32x96xbf16>
    %cst_12 = arith.constant dense<0.000000e+00> : vector<16x96xf32>
    %29 = tpu.matmul %27, %28, %cst_12 {dimension_numbers = #tpu.dot_dimension_numbers<[1], [0], [0], [1], [0, 0, 1, 1], [], []>} : vector<16x32xbf16>, vector<32x96xbf16>, vector<16x96xf32> -> vector<16x96xf32>
    %c0_13 = arith.constant 0 : index
    %c0_14 = arith.constant 0 : index
    %30 = vector.load %arg5[%c0_13, %c0_14] : memref<1x96xf32, #tpu.memory_space<vmem>>, vector<1x96xf32>
    %31 = vector.broadcast %30 : vector<1x96xf32> to vector<16x96xf32>
    %32 = arith.addf %29, %31 : vector<16x96xf32>
    %33 = vector.extract_strided_slice %32 {offsets = [0, 0], sizes = [16, 32], strides = [1, 1]} : vector<16x96xf32> to vector<16x32xf32>
    %cst_15 = arith.constant 0.353553385 : f32
    %34 = vector.broadcast %cst_15 : f32 to vector<16x32xf32>
    %35 = arith.mulf %33, %34 : vector<16x32xf32>
    %36 = vector.extract_strided_slice %32 {offsets = [0, 32], sizes = [16, 32], strides = [1, 1]} : vector<16x96xf32> to vector<16x32xf32>
    %37 = vector.extract_strided_slice %32 {offsets = [0, 64], sizes = [16, 32], strides = [1, 1]} : vector<16x96xf32> to vector<16x32xf32>
    %38 = tpu.iota {dimensions = array<i32: 1>} : vector<1x8x8xi32>
    %39 = tpu.iota {dimensions = array<i32: 2>} : vector<1x8x8xi32>
    %40 = arith.cmpi sle, %39, %38 : vector<1x8x8xi32>
    %cst_16 = arith.constant 0.000000e+00 : f32
    %cst_17 = arith.constant -1.000000e+30 : f32
    %41 = vector.broadcast %cst_16 : f32 to vector<1x8x8xf32>
    %42 = vector.broadcast %cst_17 : f32 to vector<1x8x8xf32>
    %43 = arith.select %40, %41, %42 : vector<1x8x8xi1>, vector<1x8x8xf32>
    %44 = vector.extract_strided_slice %35 {offsets = [0, 0], sizes = [16, 8], strides = [1, 1]} : vector<16x32xf32> to vector<16x8xf32>
    %45 = vector.shape_cast %44 : vector<16x8xf32> to vector<2x8x8xf32>
    %46 = arith.truncf %45 : vector<2x8x8xf32> to vector<2x8x8xbf16>
    %47 = vector.extract_strided_slice %36 {offsets = [0, 0], sizes = [16, 8], strides = [1, 1]} : vector<16x32xf32> to vector<16x8xf32>
    %48 = vector.shape_cast %47 : vector<16x8xf32> to vector<2x8x8xf32>
    %49 = arith.truncf %48 : vector<2x8x8xf32> to vector<2x8x8xbf16>
    %50 = vector.extract_strided_slice %37 {offsets = [0, 0], sizes = [16, 8], strides = [1, 1]} : vector<16x32xf32> to vector<16x8xf32>
    %51 = vector.shape_cast %50 : vector<16x8xf32> to vector<2x8x8xf32>
    %52 = arith.truncf %51 : vector<2x8x8xf32> to vector<2x8x8xbf16>
    "tpu.trace_start"() <{level = 10 : i32, message = "bqd,bkd->bqk"}> : () -> ()
    %cst_18 = arith.constant dense<0.000000e+00> : vector<2x8x8xf32>
    %53 = tpu.matmul %46, %49, %cst_18 {dimension_numbers = #tpu.dot_dimension_numbers<[2], [2], [1], [1], [0, 0, 0, 1, 1, 1], [0], [0]>} : vector<2x8x8xbf16>, vector<2x8x8xbf16>, vector<2x8x8xf32> -> vector<2x8x8xf32>
    "tpu.trace_stop"() : () -> ()
    %54 = vector.broadcast %43 : vector<1x8x8xf32> to vector<2x8x8xf32>
    %55 = arith.addf %53, %54 : vector<2x8x8xf32>
    %cst_19 = arith.constant dense<0xFF800000> : vector<2x8xf32>
    %56 = vector.multi_reduction <maximumf>, %55, %cst_19 [2] : vector<2x8x8xf32> to vector<2x8xf32>
    %57 = vector.shape_cast %56 : vector<2x8xf32> to vector<2x8x1xf32>
    %58 = vector.broadcast %57 : vector<2x8x1xf32> to vector<2x8x8xf32>
    %59 = arith.subf %55, %58 : vector<2x8x8xf32>
    %60 = math.exp %59 : vector<2x8x8xf32>
    %cst_20 = arith.constant dense<0.000000e+00> : vector<2x8xf32>
    %61 = vector.multi_reduction <add>, %60, %cst_20 [2] : vector<2x8x8xf32> to vector<2x8xf32>
    %62 = vector.shape_cast %61 : vector<2x8xf32> to vector<2x8x1xf32>
    %63 = tpu.reciprocal %62 {approx = true} : vector<2x8x1xf32> -> vector<2x8x1xf32>
    %64 = vector.broadcast %63 : vector<2x8x1xf32> to vector<2x8x8xf32>
    %65 = arith.mulf %60, %64 : vector<2x8x8xf32>
    %66 = arith.truncf %65 : vector<2x8x8xf32> to vector<2x8x8xbf16>
    "tpu.trace_start"() <{level = 10 : i32, message = "bqk,bkd->bqd"}> : () -> ()
    %cst_21 = arith.constant dense<0.000000e+00> : vector<2x8x8xf32>
    %67 = tpu.matmul %66, %52, %cst_21 {dimension_numbers = #tpu.dot_dimension_numbers<[2], [1], [1], [2], [0, 0, 0, 1, 1, 2], [0], [0]>} : vector<2x8x8xbf16>, vector<2x8x8xbf16>, vector<2x8x8xf32> -> vector<2x8x8xf32>
    "tpu.trace_stop"() : () -> ()
    %68 = vector.shape_cast %67 : vector<2x8x8xf32> to vector<16x8xf32>
    %69 = vector.extract_strided_slice %35 {offsets = [0, 8], sizes = [16, 8], strides = [1, 1]} : vector<16x32xf32> to vector<16x8xf32>
    %70 = vector.shape_cast %69 : vector<16x8xf32> to vector<2x8x8xf32>
    %71 = arith.truncf %70 : vector<2x8x8xf32> to vector<2x8x8xbf16>
    %72 = vector.extract_strided_slice %36 {offsets = [0, 8], sizes = [16, 8], strides = [1, 1]} : vector<16x32xf32> to vector<16x8xf32>
    %73 = vector.shape_cast %72 : vector<16x8xf32> to vector<2x8x8xf32>
    %74 = arith.truncf %73 : vector<2x8x8xf32> to vector<2x8x8xbf16>
    %75 = vector.extract_strided_slice %37 {offsets = [0, 8], sizes = [16, 8], strides = [1, 1]} : vector<16x32xf32> to vector<16x8xf32>
    %76 = vector.shape_cast %75 : vector<16x8xf32> to vector<2x8x8xf32>
    %77 = arith.truncf %76 : vector<2x8x8xf32> to vector<2x8x8xbf16>
    "tpu.trace_start"() <{level = 10 : i32, message = "bqd,bkd->bqk"}> : () -> ()
    %cst_22 = arith.constant dense<0.000000e+00> : vector<2x8x8xf32>
    %78 = tpu.matmul %71, %74, %cst_22 {dimension_numbers = #tpu.dot_dimension_numbers<[2], [2], [1], [1], [0, 0, 0, 1, 1, 1], [0], [0]>} : vector<2x8x8xbf16>, vector<2x8x8xbf16>, vector<2x8x8xf32> -> vector<2x8x8xf32>
    "tpu.trace_stop"() : () -> ()
    %79 = vector.broadcast %43 : vector<1x8x8xf32> to vector<2x8x8xf32>
    %80 = arith.addf %78, %79 : vector<2x8x8xf32>
    %cst_23 = arith.constant dense<0xFF800000> : vector<2x8xf32>
    %81 = vector.multi_reduction <maximumf>, %80, %cst_23 [2] : vector<2x8x8xf32> to vector<2x8xf32>
    %82 = vector.shape_cast %81 : vector<2x8xf32> to vector<2x8x1xf32>
    %83 = vector.broadcast %82 : vector<2x8x1xf32> to vector<2x8x8xf32>
    %84 = arith.subf %80, %83 : vector<2x8x8xf32>
    %85 = math.exp %84 : vector<2x8x8xf32>
    %cst_24 = arith.constant dense<0.000000e+00> : vector<2x8xf32>
    %86 = vector.multi_reduction <add>, %85, %cst_24 [2] : vector<2x8x8xf32> to vector<2x8xf32>
    %87 = vector.shape_cast %86 : vector<2x8xf32> to vector<2x8x1xf32>
    %88 = tpu.reciprocal %87 {approx = true} : vector<2x8x1xf32> -> vector<2x8x1xf32>
    %89 = vector.broadcast %88 : vector<2x8x1xf32> to vector<2x8x8xf32>
    %90 = arith.mulf %85, %89 : vector<2x8x8xf32>
    %91 = arith.truncf %90 : vector<2x8x8xf32> to vector<2x8x8xbf16>
    "tpu.trace_start"() <{level = 10 : i32, message = "bqk,bkd->bqd"}> : () -> ()
    %cst_25 = arith.constant dense<0.000000e+00> : vector<2x8x8xf32>
    %92 = tpu.matmul %91, %77, %cst_25 {dimension_numbers = #tpu.dot_dimension_numbers<[2], [1], [1], [2], [0, 0, 0, 1, 1, 2], [0], [0]>} : vector<2x8x8xbf16>, vector<2x8x8xbf16>, vector<2x8x8xf32> -> vector<2x8x8xf32>
    "tpu.trace_stop"() : () -> ()
    %93 = vector.shape_cast %92 : vector<2x8x8xf32> to vector<16x8xf32>
    %94 = vector.extract_strided_slice %35 {offsets = [0, 16], sizes = [16, 8], strides = [1, 1]} : vector<16x32xf32> to vector<16x8xf32>
    %95 = vector.shape_cast %94 : vector<16x8xf32> to vector<2x8x8xf32>
    %96 = arith.truncf %95 : vector<2x8x8xf32> to vector<2x8x8xbf16>
    %97 = vector.extract_strided_slice %36 {offsets = [0, 16], sizes = [16, 8], strides = [1, 1]} : vector<16x32xf32> to vector<16x8xf32>
    %98 = vector.shape_cast %97 : vector<16x8xf32> to vector<2x8x8xf32>
    %99 = arith.truncf %98 : vector<2x8x8xf32> to vector<2x8x8xbf16>
    %100 = vector.extract_strided_slice %37 {offsets = [0, 16], sizes = [16, 8], strides = [1, 1]} : vector<16x32xf32> to vector<16x8xf32>
    %101 = vector.shape_cast %100 : vector<16x8xf32> to vector<2x8x8xf32>
    %102 = arith.truncf %101 : vector<2x8x8xf32> to vector<2x8x8xbf16>
    "tpu.trace_start"() <{level = 10 : i32, message = "bqd,bkd->bqk"}> : () -> ()
    %cst_26 = arith.constant dense<0.000000e+00> : vector<2x8x8xf32>
    %103 = tpu.matmul %96, %99, %cst_26 {dimension_numbers = #tpu.dot_dimension_numbers<[2], [2], [1], [1], [0, 0, 0, 1, 1, 1], [0], [0]>} : vector<2x8x8xbf16>, vector<2x8x8xbf16>, vector<2x8x8xf32> -> vector<2x8x8xf32>
    "tpu.trace_stop"() : () -> ()
    %104 = vector.broadcast %43 : vector<1x8x8xf32> to vector<2x8x8xf32>
    %105 = arith.addf %103, %104 : vector<2x8x8xf32>
    %cst_27 = arith.constant dense<0xFF800000> : vector<2x8xf32>
    %106 = vector.multi_reduction <maximumf>, %105, %cst_27 [2] : vector<2x8x8xf32> to vector<2x8xf32>
    %107 = vector.shape_cast %106 : vector<2x8xf32> to vector<2x8x1xf32>
    %108 = vector.broadcast %107 : vector<2x8x1xf32> to vector<2x8x8xf32>
    %109 = arith.subf %105, %108 : vector<2x8x8xf32>
    %110 = math.exp %109 : vector<2x8x8xf32>
    %cst_28 = arith.constant dense<0.000000e+00> : vector<2x8xf32>
    %111 = vector.multi_reduction <add>, %110, %cst_28 [2] : vector<2x8x8xf32> to vector<2x8xf32>
    %112 = vector.shape_cast %111 : vector<2x8xf32> to vector<2x8x1xf32>
    %113 = tpu.reciprocal %112 {approx = true} : vector<2x8x1xf32> -> vector<2x8x1xf32>
    %114 = vector.broadcast %113 : vector<2x8x1xf32> to vector<2x8x8xf32>
    %115 = arith.mulf %110, %114 : vector<2x8x8xf32>
    %116 = arith.truncf %115 : vector<2x8x8xf32> to vector<2x8x8xbf16>
    "tpu.trace_start"() <{level = 10 : i32, message = "bqk,bkd->bqd"}> : () -> ()
    %cst_29 = arith.constant dense<0.000000e+00> : vector<2x8x8xf32>
    %117 = tpu.matmul %116, %102, %cst_29 {dimension_numbers = #tpu.dot_dimension_numbers<[2], [1], [1], [2], [0, 0, 0, 1, 1, 2], [0], [0]>} : vector<2x8x8xbf16>, vector<2x8x8xbf16>, vector<2x8x8xf32> -> vector<2x8x8xf32>
    "tpu.trace_stop"() : () -> ()
    %118 = vector.shape_cast %117 : vector<2x8x8xf32> to vector<16x8xf32>
    %119 = vector.extract_strided_slice %35 {offsets = [0, 24], sizes = [16, 8], strides = [1, 1]} : vector<16x32xf32> to vector<16x8xf32>
    %120 = vector.shape_cast %119 : vector<16x8xf32> to vector<2x8x8xf32>
    %121 = arith.truncf %120 : vector<2x8x8xf32> to vector<2x8x8xbf16>
    %122 = vector.extract_strided_slice %36 {offsets = [0, 24], sizes = [16, 8], strides = [1, 1]} : vector<16x32xf32> to vector<16x8xf32>
    %123 = vector.shape_cast %122 : vector<16x8xf32> to vector<2x8x8xf32>
    %124 = arith.truncf %123 : vector<2x8x8xf32> to vector<2x8x8xbf16>
    %125 = vector.extract_strided_slice %37 {offsets = [0, 24], sizes = [16, 8], strides = [1, 1]} : vector<16x32xf32> to vector<16x8xf32>
    %126 = vector.shape_cast %125 : vector<16x8xf32> to vector<2x8x8xf32>
    %127 = arith.truncf %126 : vector<2x8x8xf32> to vector<2x8x8xbf16>
    "tpu.trace_start"() <{level = 10 : i32, message = "bqd,bkd->bqk"}> : () -> ()
    %cst_30 = arith.constant dense<0.000000e+00> : vector<2x8x8xf32>
    %128 = tpu.matmul %121, %124, %cst_30 {dimension_numbers = #tpu.dot_dimension_numbers<[2], [2], [1], [1], [0, 0, 0, 1, 1, 1], [0], [0]>} : vector<2x8x8xbf16>, vector<2x8x8xbf16>, vector<2x8x8xf32> -> vector<2x8x8xf32>
    "tpu.trace_stop"() : () -> ()
    %129 = vector.broadcast %43 : vector<1x8x8xf32> to vector<2x8x8xf32>
    %130 = arith.addf %128, %129 : vector<2x8x8xf32>
    %cst_31 = arith.constant dense<0xFF800000> : vector<2x8xf32>
    %131 = vector.multi_reduction <maximumf>, %130, %cst_31 [2] : vector<2x8x8xf32> to vector<2x8xf32>
    %132 = vector.shape_cast %131 : vector<2x8xf32> to vector<2x8x1xf32>
    %133 = vector.broadcast %132 : vector<2x8x1xf32> to vector<2x8x8xf32>
    %134 = arith.subf %130, %133 : vector<2x8x8xf32>
    %135 = math.exp %134 : vector<2x8x8xf32>
    %cst_32 = arith.constant dense<0.000000e+00> : vector<2x8xf32>
    %136 = vector.multi_reduction <add>, %135, %cst_32 [2] : vector<2x8x8xf32> to vector<2x8xf32>
    %137 = vector.shape_cast %136 : vector<2x8xf32> to vector<2x8x1xf32>
    %138 = tpu.reciprocal %137 {approx = true} : vector<2x8x1xf32> -> vector<2x8x1xf32>
    %139 = vector.broadcast %138 : vector<2x8x1xf32> to vector<2x8x8xf32>
    %140 = arith.mulf %135, %139 : vector<2x8x8xf32>
    %141 = arith.truncf %140 : vector<2x8x8xf32> to vector<2x8x8xbf16>
    "tpu.trace_start"() <{level = 10 : i32, message = "bqk,bkd->bqd"}> : () -> ()
    %cst_33 = arith.constant dense<0.000000e+00> : vector<2x8x8xf32>
    %142 = tpu.matmul %141, %127, %cst_33 {dimension_numbers = #tpu.dot_dimension_numbers<[2], [1], [1], [2], [0, 0, 0, 1, 1, 2], [0], [0]>} : vector<2x8x8xbf16>, vector<2x8x8xbf16>, vector<2x8x8xf32> -> vector<2x8x8xf32>
    "tpu.trace_stop"() : () -> ()
    %143 = vector.shape_cast %142 : vector<2x8x8xf32> to vector<16x8xf32>
    %144 = tpu.concatenate %68, %93, %118, %143 in 1 : vector<16x8xf32>, vector<16x8xf32>, vector<16x8xf32>, vector<16x8xf32> -> vector<16x32xf32>
    %145 = arith.truncf %144 : vector<16x32xf32> to vector<16x32xbf16>
    %c0_34 = arith.constant 0 : index
    %c0_35 = arith.constant 0 : index
    %146 = vector.load %arg6[%c0_34, %c0_35] : memref<32x32xbf16, #tpu.memory_space<vmem>>, vector<32x32xbf16>
    %cst_36 = arith.constant dense<0.000000e+00> : vector<16x32xf32>
    %147 = tpu.matmul %145, %146, %cst_36 {dimension_numbers = #tpu.dot_dimension_numbers<[1], [0], [0], [1], [0, 0, 1, 1], [], []>} : vector<16x32xbf16>, vector<32x32xbf16>, vector<16x32xf32> -> vector<16x32xf32>
    %c0_37 = arith.constant 0 : index
    %c0_38 = arith.constant 0 : index
    %148 = vector.load %arg7[%c0_37, %c0_38] : memref<1x32xf32, #tpu.memory_space<vmem>>, vector<1x32xf32>
    %149 = vector.broadcast %148 : vector<1x32xf32> to vector<16x32xf32>
    %150 = arith.addf %147, %149 : vector<16x32xf32>
    %151 = arith.addf %2, %150 : vector<16x32xf32>
    %c0_39 = arith.constant 0 : index
    %c0_40 = arith.constant 0 : index
    %152 = vector.load %arg8[%c0_39, %c0_40] : memref<1x32xf32, #tpu.memory_space<vmem>>, vector<1x32xf32>
    %c0_41 = arith.constant 0 : index
    %c0_42 = arith.constant 0 : index
    %153 = vector.load %arg9[%c0_41, %c0_42] : memref<1x32xf32, #tpu.memory_space<vmem>>, vector<1x32xf32>
    %cst_43 = arith.constant dense<0.000000e+00> : vector<16xf32>
    %154 = vector.multi_reduction <add>, %151, %cst_43 [1] : vector<16x32xf32> to vector<16xf32>
    %155 = vector.shape_cast %154 : vector<16xf32> to vector<16x1xf32>
    %cst_44 = arith.constant 3.200000e+01 : f32
    %156 = vector.broadcast %cst_44 : f32 to vector<16x1xf32>
    %157 = arith.divf %155, %156 : vector<16x1xf32>
    %158 = vector.broadcast %157 : vector<16x1xf32> to vector<16x32xf32>
    %159 = arith.subf %151, %158 : vector<16x32xf32>
    %160 = arith.mulf %159, %159 : vector<16x32xf32>
    %cst_45 = arith.constant dense<0.000000e+00> : vector<16xf32>
    %161 = vector.multi_reduction <add>, %160, %cst_45 [1] : vector<16x32xf32> to vector<16xf32>
    %162 = vector.shape_cast %161 : vector<16xf32> to vector<16x1xf32>
    %cst_46 = arith.constant 3.200000e+01 : f32
    %163 = vector.broadcast %cst_46 : f32 to vector<16x1xf32>
    %164 = arith.divf %162, %163 : vector<16x1xf32>
    %165 = vector.broadcast %157 : vector<16x1xf32> to vector<16x32xf32>
    %166 = arith.subf %151, %165 : vector<16x32xf32>
    %cst_47 = arith.constant 9.99999974E-6 : f32
    %167 = vector.broadcast %cst_47 : f32 to vector<16x1xf32>
    %168 = arith.addf %164, %167 : vector<16x1xf32>
    %169 = math.rsqrt %168 : vector<16x1xf32>
    %170 = vector.broadcast %169 : vector<16x1xf32> to vector<16x32xf32>
    %171 = arith.mulf %166, %170 : vector<16x32xf32>
    %172 = vector.broadcast %152 : vector<1x32xf32> to vector<16x32xf32>
    %173 = arith.mulf %171, %172 : vector<16x32xf32>
    %174 = vector.broadcast %153 : vector<1x32xf32> to vector<16x32xf32>
    %175 = arith.addf %173, %174 : vector<16x32xf32>
    %176 = arith.truncf %175 : vector<16x32xf32> to vector<16x32xbf16>
    %c0_48 = arith.constant 0 : index
    %c0_49 = arith.constant 0 : index
    %177 = vector.load %arg10[%c0_48, %c0_49] : memref<32x128xbf16, #tpu.memory_space<vmem>>, vector<32x128xbf16>
    %cst_50 = arith.constant dense<0.000000e+00> : vector<16x128xf32>
    %178 = tpu.matmul %176, %177, %cst_50 {dimension_numbers = #tpu.dot_dimension_numbers<[1], [0], [0], [1], [0, 0, 1, 1], [], []>} : vector<16x32xbf16>, vector<32x128xbf16>, vector<16x128xf32> -> vector<16x128xf32>
    %c0_51 = arith.constant 0 : index
    %c0_52 = arith.constant 0 : index
    %179 = vector.load %arg11[%c0_51, %c0_52] : memref<1x128xf32, #tpu.memory_space<vmem>>, vector<1x128xf32>
    %180 = vector.broadcast %179 : vector<1x128xf32> to vector<16x128xf32>
    %181 = arith.addf %178, %180 : vector<16x128xf32>
    %cst_53 = arith.constant 1.702000e+00 : f32
    %182 = vector.broadcast %cst_53 : f32 to vector<16x128xf32>
    %183 = arith.mulf %182, %181 : vector<16x128xf32>
    %184 = arith.negf %183 : vector<16x128xf32>
    %185 = math.exp %184 : vector<16x128xf32>
    %cst_54 = arith.constant 1.000000e+00 : f32
    %186 = vector.broadcast %cst_54 : f32 to vector<16x128xf32>
    %187 = arith.addf %186, %185 : vector<16x128xf32>
    %188 = arith.divf %186, %187 : vector<16x128xf32>
    %189 = arith.mulf %181, %188 : vector<16x128xf32>
    %190 = arith.truncf %189 : vector<16x128xf32> to vector<16x128xbf16>
    %c0_55 = arith.constant 0 : index
    %c0_56 = arith.constant 0 : index
    %191 = vector.load %arg12[%c0_55, %c0_56] : memref<128x32xbf16, #tpu.memory_space<vmem>>, vector<128x32xbf16>
    %cst_57 = arith.constant dense<0.000000e+00> : vector<16x32xf32>
    %192 = tpu.matmul %190, %191, %cst_57 {dimension_numbers = #tpu.dot_dimension_numbers<[1], [0], [0], [1], [0, 0, 1, 1], [], []>} : vector<16x128xbf16>, vector<128x32xbf16>, vector<16x32xf32> -> vector<16x32xf32>
    %c0_58 = arith.constant 0 : index
    %c0_59 = arith.constant 0 : index
    %193 = vector.load %arg13[%c0_58, %c0_59] : memref<1x32xf32, #tpu.memory_space<vmem>>, vector<1x32xf32>
    %194 = vector.broadcast %193 : vector<1x32xf32> to vector<16x32xf32>
    %195 = arith.addf %192, %194 : vector<16x32xf32>
    %196 = arith.addf %151, %195 : vector<16x32xf32>
    %197 = vector.shape_cast %196 : vector<16x32xf32> to vector<2x8x32xf32>
    %198 = arith.truncf %197 : vector<2x8x32xf32> to vector<2x8x32xbf16>
    %c0_60 = arith.constant 0 : index
    %c0_61 = arith.constant 0 : index
    %c0_62 = arith.constant 0 : index
    %199 = vector.load %arg14[%c0_60, %c0_61, %c0_62] : memref<2x8x32xbf16, #tpu.memory_space<vmem>>, vector<2x8x32xbf16>
    tpu.vector_store %arg14[%c0_60, %c0_61, %c0_62], %198 {strides = array<i32>} : memref<2x8x32xbf16, #tpu.memory_space<vmem>>, vector<2x8x32xbf16>,
    return
  }
  func.func @transform_0(%arg0: i32) -> (i32, i32, i32) {
    %c0_i32 = arith.constant 0 : i32
    %c0_i32_0 = arith.constant 0 : i32
    %c0_i32_1 = arith.constant 0 : i32
    return %arg0, %c0_i32, %c0_i32_0 : i32, i32, i32
  }
  func.func @transform_1(%arg0: i32) -> (i32, i32) {
    %c0_i32 = arith.constant 0 : i32
    %c0_i32_0 = arith.constant 0 : i32
    %c0_i32_1 = arith.constant 0 : i32
    return %c0_i32, %c0_i32_0 : i32, i32
  }
  func.func @transform_2(%arg0: i32) -> (i32, i32) {
    %c0_i32 = arith.constant 0 : i32
    %c0_i32_0 = arith.constant 0 : i32
    %c0_i32_1 = arith.constant 0 : i32
    return %c0_i32, %c0_i32_0 : i32, i32
  }
  func.func @transform_3(%arg0: i32) -> (i32, i32) {
    %c0_i32 = arith.constant 0 : i32
    %c0_i32_0 = arith.constant 0 : i32
    %c0_i32_1 = arith.constant 0 : i32
    return %c0_i32, %c0_i32_0 : i32, i32
  }
  func.func @transform_4(%arg0: i32) -> (i32, i32) {
    %c0_i32 = arith.constant 0 : i32
    %c0_i32_0 = arith.constant 0 : i32
    %c0_i32_1 = arith.constant 0 : i32
    return %c0_i32, %c0_i32_0 : i32, i32
  }
  func.func @transform_5(%arg0: i32) -> (i32, i32) {
    %c0_i32 = arith.constant 0 : i32
    %c0_i32_0 = arith.constant 0 : i32
    %c0_i32_1 = arith.constant 0 : i32
    return %c0_i32, %c0_i32_0 : i32, i32
  }
  func.func @transform_6(%arg0: i32) -> (i32, i32) {
    %c0_i32 = arith.constant 0 : i32
    %c0_i32_0 = arith.constant 0 : i32
    %c0_i32_1 = arith.constant 0 : i32
    return %c0_i32, %c0_i32_0 : i32, i32
  }
  func.func @transform_7(%arg0: i32) -> (i32, i32) {
    %c0_i32 = arith.constant 0 : i32
    %c0_i32_0 = arith.constant 0 : i32
    %c0_i32_1 = arith.constant 0 : i32
    return %c0_i32, %c0_i32_0 : i32, i32
  }
  func.func @transform_8(%arg0: i32) -> (i32, i32) {
    %c0_i32 = arith.constant 0 : i32
    %c0_i32_0 = arith.constant 0 : i32
    %c0_i32_1 = arith.constant 0 : i32
    return %c0_i32, %c0_i32_0 : i32, i32
  }
  func.func @transform_9(%arg0: i32) -> (i32, i32) {
    %c0_i32 = arith.constant 0 : i32
    %c0_i32_0 = arith.constant 0 : i32
    %c0_i32_1 = arith.constant 0 : i32
    return %c0_i32, %c0_i32_0 : i32, i32
  }
  func.func @transform_10(%arg0: i32) -> (i32, i32) {
    %c0_i32 = arith.constant 0 : i32
    %c0_i32_0 = arith.constant 0 : i32
    %c0_i32_1 = arith.constant 0 : i32
    return %c0_i32, %c0_i32_0 : i32, i32
  }
  func.func @transform_11(%arg0: i32) -> (i32, i32) {
    %c0_i32 = arith.constant 0 : i32
    %c0_i32_0 = arith.constant 0 : i32
    %c0_i32_1 = arith.constant 0 : i32
    return %c0_i32, %c0_i32_0 : i32, i32
  }
  func.func @transform_12(%arg0: i32) -> (i32, i32) {
    %c0_i32 = arith.constant 0 : i32
    %c0_i32_0 = arith.constant 0 : i32
    %c0_i32_1 = arith.constant 0 : i32
    return %c0_i32, %c0_i32_0 : i32, i32
  }
  func.func @transform_13(%arg0: i32) -> (i32, i32, i32) {
    %c0_i32 = arith.constant 0 : i32
    %c0_i32_0 = arith.constant 0 : i32
    %c0_i32_1 = arith.constant 0 : i32
    return %arg0, %c0_i32, %c0_i32_0 : i32, i32, i32
  }
}

</mosaic_0001>

<llo_original>
// kernel: tpu_custom_call.1
$region0: #{tpu_custom_call.1}
  #allocation0 [shape = 'u32[]', space=smem, size = 0x4, offset = 0x4, fixed_abs, tag = 'smem constant byte address 0x4 - core index']
  #allocation1 [shape = 'u32[144,128]{1,0:T(1,128)}', space=vmem, size = 0x12000, scoped, tag = 'internal scratch']
  %s0 = inlined_call_operand.vmem [shape: bf16[2,8,32], index: 0, kind: input, shape index: {}]
  %s1 = inlined_call_operand.vmem [shape: f32[1,32], index: 1, kind: input, shape index: {}]
  %s2 = inlined_call_operand.vmem [shape: f32[1,32], index: 2, kind: input, shape index: {}]
  %s3 = inlined_call_operand.vmem [shape: bf16[32,96], index: 3, kind: input, shape index: {}]
  %s4 = inlined_call_operand.vmem [shape: f32[1,96], index: 4, kind: input, shape index: {}]
  %s5 = inlined_call_operand.vmem [shape: bf16[32,32], index: 5, kind: input, shape index: {}]
  %s6 = inlined_call_operand.vmem [shape: f32[1,32], index: 6, kind: input, shape index: {}]
  %s7 = inlined_call_operand.vmem [shape: f32[1,32], index: 7, kind: input, shape index: {}]
  %s8 = inlined_call_operand.vmem [shape: f32[1,32], index: 8, kind: input, shape index: {}]
  %s9 = inlined_call_operand.vmem [shape: bf16[32,128], index: 9, kind: input, shape index: {}]
  %s10 = inlined_call_operand.vmem [shape: f32[1,128], index: 10, kind: input, shape index: {}]
  %s11 = inlined_call_operand.vmem [shape: bf16[128,32], index: 11, kind: input, shape index: {}]
  %s12 = inlined_call_operand.vmem [shape: f32[1,32], index: 12, kind: input, shape index: {}]
  %s13 = inlined_call_operand.hbm [shape: bf16[2,8,32], index: 13, kind: output, shape index: {}]
  %s14 = sld [smem:[#allocation0]]
  $region62: #{tpu_custom_call.1} parent=0
    _
  %s16 = ssub.s32 1, %s14
  %s17 = scalar_select 0, %s16, %s14
  $region1: #{tpu_custom_call.1} parent=0
    #allocation2 [shape = 'u8[4096]{0}', space=vmem, size = 0x1000, scoped, tag = 'output window, operand 0, single buffered']
    #allocation3 [shape = 's32[1]{0}', space=sflag, size = 0x4, scoped, tag = 'scoped memory for tpu_custom_call.1']
    %18 = vsyncpa [#allocation3], 0
    // Predicated region
    $region2: #{tpu_custom_call.1} parent=1 // pred_check
      _
    $region3: #{tpu_custom_call.1} parent=1 // pred_check_branch
      %20 = sbr.rel (0) target = $region5
    $region4: #{tpu_custom_call.1} parent=1 // pred_region
      _
    $region5: #{tpu_custom_call.1} parent=1 // pred_fallthru
      _
    // Predicated region
    $region6: #{tpu_custom_call.1} parent=1 // pred_check
      _
    $region7: #{tpu_custom_call.1} parent=1 // pred_check_branch
      %22 = sbr.rel (0) target = $region9
    $region8: #{tpu_custom_call.1} parent=1 // pred_region
      _
    $region9: #{tpu_custom_call.1} parent=1 // pred_fallthru
      _
    // Predicated region
    $region10: #{tpu_custom_call.1} parent=1 // pred_check
      _
    $region11: #{tpu_custom_call.1} parent=1 // pred_check_branch
      %24 = sbr.rel (0) target = $region13
    $region12: #{tpu_custom_call.1} parent=1 // pred_region
      _
    $region13: #{tpu_custom_call.1} parent=1 // pred_fallthru
      _
    // Predicated region
    $region14: #{tpu_custom_call.1} parent=1 // pred_check
      _
    $region15: #{tpu_custom_call.1} parent=1 // pred_check_branch
      %26 = sbr.rel (0) target = $region17
    $region16: #{tpu_custom_call.1} parent=1 // pred_region
      _
    $region17: #{tpu_custom_call.1} parent=1 // pred_fallthru
      _
    // Predicated region
    $region18: #{tpu_custom_call.1} parent=1 // pred_check
      _
    $region19: #{tpu_custom_call.1} parent=1 // pred_check_branch
      %28 = sbr.rel (0) target = $region21
    $region20: #{tpu_custom_call.1} parent=1 // pred_region
      _
    $region21: #{tpu_custom_call.1} parent=1 // pred_fallthru
      _
    // Predicated region
    $region22: #{tpu_custom_call.1} parent=1 // pred_check
      _
    $region23: #{tpu_custom_call.1} parent=1 // pred_check_branch
      %30 = sbr.rel (0) target = $region25
    $region24: #{tpu_custom_call.1} parent=1 // pred_region
      _
    $region25: #{tpu_custom_call.1} parent=1 // pred_fallthru
      _
    // Predicated region
    $region26: #{tpu_custom_call.1} parent=1 // pred_check
      _
    $region27: #{tpu_custom_call.1} parent=1 // pred_check_branch
      %32 = sbr.rel (0) target = $region29
    $region28: #{tpu_custom_call.1} parent=1 // pred_region
      _
    $region29: #{tpu_custom_call.1} parent=1 // pred_fallthru
      _
    // Predicated region
    $region30: #{tpu_custom_call.1} parent=1 // pred_check
      _
    $region31: #{tpu_custom_call.1} parent=1 // pred_check_branch
      %34 = sbr.rel (0) target = $region33
    $region32: #{tpu_custom_call.1} parent=1 // pred_region
      _
    $region33: #{tpu_custom_call.1} parent=1 // pred_fallthru
      _
    // Predicated region
    $region34: #{tpu_custom_call.1} parent=1 // pred_check
      _
    $region35: #{tpu_custom_call.1} parent=1 // pred_check_branch
      %36 = sbr.rel (0) target = $region37
    $region36: #{tpu_custom_call.1} parent=1 // pred_region
      _
    $region37: #{tpu_custom_call.1} parent=1 // pred_fallthru
      _
    // Predicated region
    $region38: #{tpu_custom_call.1} parent=1 // pred_check
      _
    $region39: #{tpu_custom_call.1} parent=1 // pred_check_branch
      %38 = sbr.rel (0) target = $region41
    $region40: #{tpu_custom_call.1} parent=1 // pred_region
      _
    $region41: #{tpu_custom_call.1} parent=1 // pred_fallthru
      _
    // Predicated region
    $region42: #{tpu_custom_call.1} parent=1 // pred_check
      _
    $region43: #{tpu_custom_call.1} parent=1 // pred_check_branch
      %40 = sbr.rel (0) target = $region45
    $region44: #{tpu_custom_call.1} parent=1 // pred_region
      _
    $region45: #{tpu_custom_call.1} parent=1 // pred_fallthru
      _
    // Predicated region
    $region46: #{tpu_custom_call.1} parent=1 // pred_check
      _
    $region47: #{tpu_custom_call.1} parent=1 // pred_check_branch
      %42 = sbr.rel (0) target = $region49
    $region48: #{tpu_custom_call.1} parent=1 // pred_region
      _
    $region49: #{tpu_custom_call.1} parent=1 // pred_fallthru
      _
    // Predicated region
    $region50: #{tpu_custom_call.1} parent=1 // pred_check
      _
    $region51: #{tpu_custom_call.1} parent=1 // pred_check_branch
      %44 = sbr.rel (0) target = $region53
    $region52: #{tpu_custom_call.1} parent=1 // pred_region
      _
    $region53: #{tpu_custom_call.1} parent=1 // pred_fallthru
      _
    %v46 = vld [vmem:[%s0] sm:$0xf]
    %v47 = vld [vmem:[%s0 + $0x4] sm:$0xf]
    %v48 = vunpack.c.l.bf16 %v46
    %v49 = vunpack.c.l.bf16 %v47
    %v50 = vld [vmem:[%s1] sm:$0x1]
    %v51 = vld [vmem:[%s2] sm:$0x1]
    %vm52 = vcmask 261120
    %v53 = vsel %vm52, %v48, 0.0
    %54 = vadd.xlane.f32.xlu0 %v53
    %v55 = vpop.xlane.xlu0 %54
    %v56 = vsel %vm52, %v49, 0.0
    %57 = vadd.xlane.f32.xlu0 %v56
    %v58 = vpop.xlane.xlu0 %57
    %v59 = vrcp.pop 32.0
    %v60 = vmul.f32 %v55, %v59
    %v61 = vmul.f32 %v58, %v59
    %v62 = vsub.f32 %v48, %v60
    %v63 = vsub.f32 %v49, %v61
    %v64 = vmul.f32 %v62, %v62
    %v65 = vmul.f32 %v63, %v63
    %v66 = vsel %vm52, %v64, 0.0
    %67 = vadd.xlane.f32.xlu0 %v66
    %v68 = vpop.xlane.xlu0 %67
    %v69 = vsel %vm52, %v65, 0.0
    %70 = vadd.xlane.f32.xlu0 %v69
    %v71 = vpop.xlane.xlu0 %70
    %v72 = vmul.f32 %v68, %v59
    %v73 = vmul.f32 %v71, %v59
    %v74 = vadd.f32 %v72, 1e-05
    %v75 = vadd.f32 %v73, 1e-05
    %v76 = vrsqrt.pop %v74
    %v77 = vrsqrt.pop %v75
    %v78 = vmul.f32 %v62, %v76
    %v79 = vmul.f32 %v63, %v77
    %v81 = vlaneseq
    %v82 = vshrl.u32 %v81, 7
    %v83 = vsub.s32 0, %v82
    %v84 = vrot.slane %v50, %v83
    %v86 = vmul.f32 %v78, %v84
    %v87 = vmul.f32 %v79, %v84
    %v89 = vlaneseq
    %v90 = vshrl.u32 %v89, 7
    %v91 = vsub.s32 0, %v90
    %v92 = vrot.slane %v51, %v91
    %v94 = vadd.f32 %v86, %v92
    %v95 = vadd.f32 %v87, %v92
    %v96 = vpack.c.bf16 %v95, %v94
    %v97 = vld [vmem:[%s3] sm:$0xf]
    %v98 = vld [vmem:[%s3 + $0x4] sm:$0xf]
    %v99 = vld [vmem:[%s3 + $0x8] sm:$0xf]
    %v100 = vld [vmem:[%s3 + $0xc] sm:$0xf]
    %v101 = vld [vmem:[%s4] sm:$0x1]
    %v103 = vlaneseq
    %v104 = vshrl.u32 %v103, 7
    %v105 = vsub.s32 0, %v104
    %v106 = vrot.slane %v101, %v105
    %v112 = vunpack.c.l.b16 %v97
    %v113 = vunpack.c.l.b16 %v98
    %v114 = vunpack.c.l.b16 %v99
    %v115 = vunpack.c.l.b16 %v100
    %v116 = vpack.c.b16 %v113, %v112
    %v117 = vpack.c.b16 %v115, %v114
    %v121 = vsel %vm52, %v96, 0
    %123 = vmatprep.subr.bf16.mxu0 0
    %124 = vmatpush1.bf16.msra.mxu0 %v116
    %125 = vmatprep.subr.bf16.mxu0 0
    %126 = vmatpush1.bf16.msra.mxu0 %v117
    %127 = vmatprep.subr.bf16.mxu0 0
    %128 = vmatpush1.bf16.msra.mxu0 0
    %129 = vmatprep.subr.bf16.mxu0 0
    %130 = vmatpush1.bf16.msra.mxu0 0
    %131 = vmatprep.subr.bf16.mxu0 0
    %132 = vmatpush1.bf16.msra.mxu0 0
    %133 = vmatprep.subr.bf16.mxu0 0
    %134 = vmatpush1.bf16.msra.mxu0 0
    %135 = vmatprep.subr.bf16.mxu0 0
    %136 = vmatpush1.bf16.msra.mxu0 0
    %137 = vmatprep.subr.bf16.mxu0 0
    %138 = vmatpush1.bf16.msra.mxu0 0
    %139 = vmatprep.subr.bf16.mxu0 0
    %140 = vmatpush1.bf16.msra.mxu0 0
    %141 = vmatprep.subr.bf16.mxu0 0
    %142 = vmatpush1.bf16.msra.mxu0 0
    %143 = vmatprep.subr.bf16.mxu0 0
    %144 = vmatpush1.bf16.msra.mxu0 0
    %145 = vmatprep.subr.bf16.mxu0 0
    %146 = vmatpush1.bf16.msra.mxu0 0
    %147 = vmatprep.subr.bf16.mxu0 0
    %148 = vmatpush1.bf16.msra.mxu0 0
    %149 = vmatprep.subr.bf16.mxu0 0
    %150 = vmatpush1.bf16.msra.mxu0 0
    %151 = vmatprep.subr.bf16.mxu0 0
    %152 = vmatpush1.bf16.msra.mxu0 0
    %153 = vmatprep.subr.bf16.mxu0 0
    %154 = vmatpush1.bf16.msra.mxu0 0
    %155 = vmatprep.mubr.bf16.mxu0 0
    %156 = vmatmul.mubr.bf16.gmra.mrb[0].mxu0 %v121
    %v157 = vpop.f32.mrb[0].mxu0
    %v158 = vadd.f32 %v106, %v157
    %v159 = vpop.f32.mrb[0].mxu0
    %v160 = vpop.f32.mrb[0].mxu0
    %v161 = vadd.f32 %v106, %v160
    %v162 = vpop.f32.mrb[0].mxu0
    %163 = vdwg.mxu0
    %v164 = vmul.f32 %v158, 0.35355338
    %v165 = vmul.f32 %v161, 0.35355338
    %v166 = vlaneseq
    %v167 = vshrl.u32 %v166, 7
    %v168 = vlaneseq
    %v169 = vand.u32 %v168, 127
    %vm170 = vcmp.le.s32.totalorder %v169, %v167
    %v171 = vsel %vm170, 0.0, -1e+30
    %v172 = vpack.c.bf16 %v164, %v164
    %v173 = vpack.c.bf16 %v165, %v165
    %v174 = vpack.c.bf16 %v158, %v158
    %v175 = vpack.c.bf16 %v161, %v161
    %177 = vrot.lane.b32.xlu0 %v174, 96
    %v178 = vpop.permute.xlu0 %177
    %vm179 = vcmask 64512
    %v181 = vsel %vm179, %v172, 0
    %v184 = vsel %vm179, %v178, 0
    %186 = vmatprep.subr.bf16.mxu0 0
    %187 = vmatpush1.bf16.xpose.msra.mxu0 %v184
    %188 = vmatprep.subr.bf16.mxu0 0
    %189 = vmatpush1.bf16.xpose.msra.mxu0 0
    %190 = vmatprep.subr.bf16.mxu0 0
    %191 = vmatpush1.bf16.xpose.msra.mxu0 0
    %192 = vmatprep.subr.bf16.mxu0 0
    %193 = vmatpush1.bf16.xpose.msra.mxu0 0
    %194 = vmatprep.subr.bf16.mxu0 0
    %195 = vmatpush1.bf16.xpose.msra.mxu0 0
    %196 = vmatprep.subr.bf16.mxu0 0
    %197 = vmatpush1.bf16.xpose.msra.mxu0 0
    %198 = vmatprep.subr.bf16.mxu0 0
    %199 = vmatpush1.bf16.xpose.msra.mxu0 0
    %200 = vmatprep.subr.bf16.mxu0 0
    %201 = vmatpush1.bf16.xpose.msra.mxu0 0
    %202 = vmatprep.subr.bf16.mxu0 0
    %203 = vmatpush1.bf16.xpose.msra.mxu0 0
    %204 = vmatprep.subr.bf16.mxu0 0
    %205 = vmatpush1.bf16.xpose.msra.mxu0 0
    %206 = vmatprep.subr.bf16.mxu0 0
    %207 = vmatpush1.bf16.xpose.msra.mxu0 0
    %208 = vmatprep.subr.bf16.mxu0 0
    %209 = vmatpush1.bf16.xpose.msra.mxu0 0
    %210 = vmatprep.subr.bf16.mxu0 0
    %211 = vmatpush1.bf16.xpose.msra.mxu0 0
    %212 = vmatprep.subr.bf16.mxu0 0
    %213 = vmatpush1.bf16.xpose.msra.mxu0 0
    %214 = vmatprep.subr.bf16.mxu0 0
    %215 = vmatpush1.bf16.xpose.msra.mxu0 0
    %216 = vmatprep.subr.bf16.mxu0 0
    %217 = vmatpush1.bf16.xpose.msra.mxu0 0
    %218 = vmatprep.mubr.bf16.mxu0 0
    %219 = vmatmul.mubr.bf16.gmra.mrb[0].mxu0 %v181
    %v220 = vpop.f32.mrb[0].mxu0
    %v221 = vadd.f32 %v171, %v220
    %v222 = vpop.f32.mrb[0].mxu0
    %v223 = vpop.f32.mrb[0].mxu0
    %v224 = vpop.f32.mrb[0].mxu0
    %225 = vdwg.mxu0
    %227 = vrot.lane.b32.xlu0 %v175, 96
    %v228 = vpop.permute.xlu0 %227
    %v230 = vsel %vm179, %v173, 0
    %v233 = vsel %vm179, %v228, 0
    %235 = vmatprep.subr.bf16.mxu0 0
    %236 = vmatpush1.bf16.xpose.msra.mxu0 %v233
    %237 = vmatprep.subr.bf16.mxu0 0
    %238 = vmatpush1.bf16.xpose.msra.mxu0 0
    %239 = vmatprep.subr.bf16.mxu0 0
    %240 = vmatpush1.bf16.xpose.msra.mxu0 0
    %241 = vmatprep.subr.bf16.mxu0 0
    %242 = vmatpush1.bf16.xpose.msra.mxu0 0
    %243 = vmatprep.subr.bf16.mxu0 0
    %244 = vmatpush1.bf16.xpose.msra.mxu0 0
    %245 = vmatprep.subr.bf16.mxu0 0
    %246 = vmatpush1.bf16.xpose.msra.mxu0 0
    %247 = vmatprep.subr.bf16.mxu0 0
    %248 = vmatpush1.bf16.xpose.msra.mxu0 0
    %249 = vmatprep.subr.bf16.mxu0 0
    %250 = vmatpush1.bf16.xpose.msra.mxu0 0
    %251 = vmatprep.subr.bf16.mxu0 0
    %252 = vmatpush1.bf16.xpose.msra.mxu0 0
    %253 = vmatprep.subr.bf16.mxu0 0
    %254 = vmatpush1.bf16.xpose.msra.mxu0 0
    %255 = vmatprep.subr.bf16.mxu0 0
    %256 = vmatpush1.bf16.xpose.msra.mxu0 0
    %257 = vmatprep.subr.bf16.mxu0 0
    %258 = vmatpush1.bf16.xpose.msra.mxu0 0
    %259 = vmatprep.subr.bf16.mxu0 0
    %260 = vmatpush1.bf16.xpose.msra.mxu0 0
    %261 = vmatprep.subr.bf16.mxu0 0
    %262 = vmatpush1.bf16.xpose.msra.mxu0 0
    %263 = vmatprep.subr.bf16.mxu0 0
    %264 = vmatpush1.bf16.xpose.msra.mxu0 0
    %265 = vmatprep.subr.bf16.mxu0 0
    %266 = vmatpush1.bf16.xpose.msra.mxu0 0
    %267 = vmatprep.mubr.bf16.mxu0 0
    %268 = vmatmul.mubr.bf16.gmra.mrb[0].mxu0 %v230
    %v269 = vpop.f32.mrb[0].mxu0
    %v270 = vadd.f32 %v171, %v269
    %v271 = vpop.f32.mrb[0].mxu0
    %v272 = vpop.f32.mrb[0].mxu0
    %v273 = vpop.f32.mrb[0].mxu0
    %274 = vdwg.mxu0
    %v275 = vsel %vm179, %v221, -inf
    %276 = vmax.xlane.f32.xlu0 %v275
    %v277 = vpop.xlane.xlu0 %276
    %v278 = vsel %vm179, %v270, -inf
    %279 = vmax.xlane.f32.xlu0 %v278
    %v280 = vpop.xlane.xlu0 %279
    %v281 = vsub.f32 %v221, %v277
    %v282 = vsub.f32 %v270, %v280
    %v283 = vmul.f32 %v281, 1.442695
    %v284 = vpow.pop %v283
    %v285 = vmul.f32 %v282, 1.442695
    %v286 = vpow.pop %v285
    %v287 = vsel %vm179, %v284, 0.0
    %288 = vadd.xlane.f32.xlu0 %v287
    %v289 = vpop.xlane.xlu0 %288
    %v290 = vsel %vm179, %v286, 0.0
    %291 = vadd.xlane.f32.xlu0 %v290
    %v292 = vpop.xlane.xlu0 %291
    %v293 = vrcp.pop %v289
    %v294 = vrcp.pop %v292
    %v295 = vmul.f32 %v284, %v293
    %v296 = vmul.f32 %v286, %v294
    %v297 = vpack.c.bf16 %v295, %v295
    %v298 = vpack.c.bf16 %v296, %v296
    %299 = vrot.lane.b32.xlu0 %v174, 64
    %v300 = vpop.permute.xlu0 %299
    %v302 = vsel %vm179, %v297, 0
    %vm304 = vcmask 1043456
    %v306 = vsel %vm304, %v300, 0
    %308 = vmatprep.subr.bf16.mxu0 0
    %309 = vmatpush1.bf16.msra.mxu0 %v306
    %310 = vmatprep.subr.bf16.mxu0 0
    %311 = vmatpush1.bf16.msra.mxu0 0
    %312 = vmatprep.subr.bf16.mxu0 0
    %313 = vmatpush1.bf16.msra.mxu0 0
    %314 = vmatprep.subr.bf16.mxu0 0
    %315 = vmatpush1.bf16.msra.mxu0 0
    %316 = vmatprep.subr.bf16.mxu0 0
    %317 = vmatpush1.bf16.msra.mxu0 0
    %318 = vmatprep.subr.bf16.mxu0 0
    %319 = vmatpush1.bf16.msra.mxu0 0
    %320 = vmatprep.subr.bf16.mxu0 0
    %321 = vmatpush1.bf16.msra.mxu0 0
    %322 = vmatprep.subr.bf16.mxu0 0
    %323 = vmatpush1.bf16.msra.mxu0 0
    %324 = vmatprep.subr.bf16.mxu0 0
    %325 = vmatpush1.bf16.msra.mxu0 0
    %326 = vmatprep.subr.bf16.mxu0 0
    %327 = vmatpush1.bf16.msra.mxu0 0
    %328 = vmatprep.subr.bf16.mxu0 0
    %329 = vmatpush1.bf16.msra.mxu0 0
    %330 = vmatprep.subr.bf16.mxu0 0
    %331 = vmatpush1.bf16.msra.mxu0 0
    %332 = vmatprep.subr.bf16.mxu0 0
    %333 = vmatpush1.bf16.msra.mxu0 0
    %334 = vmatprep.subr.bf16.mxu0 0
    %335 = vmatpush1.bf16.msra.mxu0 0
    %336 = vmatprep.subr.bf16.mxu0 0
    %337 = vmatpush1.bf16.msra.mxu0 0
    %338 = vmatprep.subr.bf16.mxu0 0
    %339 = vmatpush1.bf16.msra.mxu0 0
    %340 = vmatprep.mubr.bf16.mxu0 0
    %341 = vmatmul.mubr.bf16.gmra.mrb[0].mxu0 %v302
    %v342 = vpop.f32.mrb[0].mxu0
    %v343 = vadd.f32 0.0, %v342
    %v344 = vpop.f32.mrb[0].mxu0
    %v345 = vpop.f32.mrb[0].mxu0
    %v346 = vpop.f32.mrb[0].mxu0
    %347 = vdwg.mxu0
    %348 = vrot.lane.b32.xlu0 %v175, 64
    %v349 = vpop.permute.xlu0 %348
    %v351 = vsel %vm179, %v298, 0
    %v354 = vsel %vm304, %v349, 0
    %356 = vmatprep.subr.bf16.mxu0 0
    %357 = vmatpush1.bf16.msra.mxu0 %v354
    %358 = vmatprep.subr.bf16.mxu0 0
    %359 = vmatpush1.bf16.msra.mxu0 0
    %360 = vmatprep.subr.bf16.mxu0 0
    %361 = vmatpush1.bf16.msra.mxu0 0
    %362 = vmatprep.subr.bf16.mxu0 0
    %363 = vmatpush1.bf16.msra.mxu0 0
    %364 = vmatprep.subr.bf16.mxu0 0
    %365 = vmatpush1.bf16.msra.mxu0 0
    %366 = vmatprep.subr.bf16.mxu0 0
    %367 = vmatpush1.bf16.msra.mxu0 0
    %368 = vmatprep.subr.bf16.mxu0 0
    %369 = vmatpush1.bf16.msra.mxu0 0
    %370 = vmatprep.subr.bf16.mxu0 0
    %371 = vmatpush1.bf16.msra.mxu0 0
    %372 = vmatprep.subr.bf16.mxu0 0
    %373 = vmatpush1.bf16.msra.mxu0 0
    %374 = vmatprep.subr.bf16.mxu0 0
    %375 = vmatpush1.bf16.msra.mxu0 0
    %376 = vmatprep.subr.bf16.mxu0 0
    %377 = vmatpush1.bf16.msra.mxu0 0
    %378 = vmatprep.subr.bf16.mxu0 0
    %379 = vmatpush1.bf16.msra.mxu0 0
    %380 = vmatprep.subr.bf16.mxu0 0
    %381 = vmatpush1.bf16.msra.mxu0 0
    %382 = vmatprep.subr.bf16.mxu0 0
    %383 = vmatpush1.bf16.msra.mxu0 0
    %384 = vmatprep.subr.bf16.mxu0 0
    %385 = vmatpush1.bf16.msra.mxu0 0
    %386 = vmatprep.subr.bf16.mxu0 0
    %387 = vmatpush1.bf16.msra.mxu0 0
    %388 = vmatprep.mubr.bf16.mxu0 0
    %389 = vmatmul.mubr.bf16.gmra.mrb[0].mxu0 %v351
    %v390 = vpop.f32.mrb[0].mxu0
    %v391 = vadd.f32 0.0, %v390
    %v392 = vpop.f32.mrb[0].mxu0
    %v393 = vpop.f32.mrb[0].mxu0
    %v394 = vpop.f32.mrb[0].mxu0
    %395 = vdwg.mxu0
    %397 = vrot.lane.b32.xlu0 %v172, 120
    %v398 = vpop.permute.xlu0 %397
    %399 = vrot.lane.b32.xlu0 %v174, 88
    %v400 = vpop.permute.xlu0 %399
    %v402 = vsel %vm179, %v398, 0
    %v405 = vsel %vm179, %v400, 0
    %407 = vmatprep.subr.bf16.mxu0 0
    %408 = vmatpush1.bf16.xpose.msra.mxu0 %v405
    %409 = vmatprep.subr.bf16.mxu0 0
    %410 = vmatpush1.bf16.xpose.msra.mxu0 0
    %411 = vmatprep.subr.bf16.mxu0 0
    %412 = vmatpush1.bf16.xpose.msra.mxu0 0
    %413 = vmatprep.subr.bf16.mxu0 0
    %414 = vmatpush1.bf16.xpose.msra.mxu0 0
    %415 = vmatprep.subr.bf16.mxu0 0
    %416 = vmatpush1.bf16.xpose.msra.mxu0 0
    %417 = vmatprep.subr.bf16.mxu0 0
    %418 = vmatpush1.bf16.xpose.msra.mxu0 0
    %419 = vmatprep.subr.bf16.mxu0 0
    %420 = vmatpush1.bf16.xpose.msra.mxu0 0
    %421 = vmatprep.subr.bf16.mxu0 0
    %422 = vmatpush1.bf16.xpose.msra.mxu0 0
    %423 = vmatprep.subr.bf16.mxu0 0
    %424 = vmatpush1.bf16.xpose.msra.mxu0 0
    %425 = vmatprep.subr.bf16.mxu0 0
    %426 = vmatpush1.bf16.xpose.msra.mxu0 0
    %427 = vmatprep.subr.bf16.mxu0 0
    %428 = vmatpush1.bf16.xpose.msra.mxu0 0
    %429 = vmatprep.subr.bf16.mxu0 0
    %430 = vmatpush1.bf16.xpose.msra.mxu0 0
    %431 = vmatprep.subr.bf16.mxu0 0
    %432 = vmatpush1.bf16.xpose.msra.mxu0 0
    %433 = vmatprep.subr.bf16.mxu0 0
    %434 = vmatpush1.bf16.xpose.msra.mxu0 0
    %435 = vmatprep.subr.bf16.mxu0 0
    %436 = vmatpush1.bf16.xpose.msra.mxu0 0
    %437 = vmatprep.subr.bf16.mxu0 0
    %438 = vmatpush1.bf16.xpose.msra.mxu0 0
    %439 = vmatprep.mubr.bf16.mxu0 0
    %440 = vmatmul.mubr.bf16.gmra.mrb[0].mxu0 %v402
    %v441 = vpop.f32.mrb[0].mxu0
    %v442 = vadd.f32 %v171, %v441
    %v443 = vpop.f32.mrb[0].mxu0
    %v444 = vpop.f32.mrb[0].mxu0
    %v445 = vpop.f32.mrb[0].mxu0
    %446 = vdwg.mxu0
    %448 = vrot.lane.b32.xlu0 %v173, 120
    %v449 = vpop.permute.xlu0 %448
    %450 = vrot.lane.b32.xlu0 %v175, 88
    %v451 = vpop.permute.xlu0 %450
    %v453 = vsel %vm179, %v449, 0
    %v456 = vsel %vm179, %v451, 0
    %458 = vmatprep.subr.bf16.mxu0 0
    %459 = vmatpush1.bf16.xpose.msra.mxu0 %v456
    %460 = vmatprep.subr.bf16.mxu0 0
    %461 = vmatpush1.bf16.xpose.msra.mxu0 0
    %462 = vmatprep.subr.bf16.mxu0 0
    %463 = vmatpush1.bf16.xpose.msra.mxu0 0
    %464 = vmatprep.subr.bf16.mxu0 0
    %465 = vmatpush1.bf16.xpose.msra.mxu0 0
    %466 = vmatprep.subr.bf16.mxu0 0
    %467 = vmatpush1.bf16.xpose.msra.mxu0 0
    %468 = vmatprep.subr.bf16.mxu0 0
    %469 = vmatpush1.bf16.xpose.msra.mxu0 0
    %470 = vmatprep.subr.bf16.mxu0 0
    %471 = vmatpush1.bf16.xpose.msra.mxu0 0
    %472 = vmatprep.subr.bf16.mxu0 0
    %473 = vmatpush1.bf16.xpose.msra.mxu0 0
    %474 = vmatprep.subr.bf16.mxu0 0
    %475 = vmatpush1.bf16.xpose.msra.mxu0 0
    %476 = vmatprep.subr.bf16.mxu0 0
    %477 = vmatpush1.bf16.xpose.msra.mxu0 0
    %478 = vmatprep.subr.bf16.mxu0 0
    %479 = vmatpush1.bf16.xpose.msra.mxu0 0
    %480 = vmatprep.subr.bf16.mxu0 0
    %481 = vmatpush1.bf16.xpose.msra.mxu0 0
    %482 = vmatprep.subr.bf16.mxu0 0
    %483 = vmatpush1.bf16.xpose.msra.mxu0 0
    %484 = vmatprep.subr.bf16.mxu0 0
    %485 = vmatpush1.bf16.xpose.msra.mxu0 0
    %486 = vmatprep.subr.bf16.mxu0 0
    %487 = vmatpush1.bf16.xpose.msra.mxu0 0
    %488 = vmatprep.subr.bf16.mxu0 0
    %489 = vmatpush1.bf16.xpose.msra.mxu0 0
    %490 = vmatprep.mubr.bf16.mxu0 0
    %491 = vmatmul.mubr.bf16.gmra.mrb[0].mxu0 %v453
    %v492 = vpop.f32.mrb[0].mxu0
    %v493 = vadd.f32 %v171, %v492
    %v494 = vpop.f32.mrb[0].mxu0
    %v495 = vpop.f32.mrb[0].mxu0
    %v496 = vpop.f32.mrb[0].mxu0
    %497 = vdwg.mxu0
    %v498 = vsel %vm179, %v442, -inf
    %499 = vmax.xlane.f32.xlu0 %v498
    %v500 = vpop.xlane.xlu0 %499
    %v501 = vsel %vm179, %v493, -inf
    %502 = vmax.xlane.f32.xlu0 %v501
    %v503 = vpop.xlane.xlu0 %502
    %v504 = vsub.f32 %v442, %v500
    %v505 = vsub.f32 %v493, %v503
    %v506 = vmul.f32 %v504, 1.442695
    %v507 = vpow.pop %v506
    %v508 = vmul.f32 %v505, 1.442695
    %v509 = vpow.pop %v508
    %v510 = vsel %vm179, %v507, 0.0
    %511 = vadd.xlane.f32.xlu0 %v510
    %v512 = vpop.xlane.xlu0 %511
    %v513 = vsel %vm179, %v509, 0.0
    %514 = vadd.xlane.f32.xlu0 %v513
    %v515 = vpop.xlane.xlu0 %514
    %v516 = vrcp.pop %v512
    %v517 = vrcp.pop %v515
    %v518 = vmul.f32 %v507, %v516
    %v519 = vmul.f32 %v509, %v517
    %v520 = vpack.c.bf16 %v518, %v518
    %v521 = vpack.c.bf16 %v519, %v519
    %522 = vrot.lane.b32.xlu0 %v174, 56
    %v523 = vpop.permute.xlu0 %522
    %v525 = vsel %vm179, %v520, 0
    %v528 = vsel %vm304, %v523, 0
    %530 = vmatprep.subr.bf16.mxu0 0
    %531 = vmatpush1.bf16.msra.mxu0 %v528
    %532 = vmatprep.subr.bf16.mxu0 0
    %533 = vmatpush1.bf16.msra.mxu0 0
    %534 = vmatprep.subr.bf16.mxu0 0
    %535 = vmatpush1.bf16.msra.mxu0 0
    %536 = vmatprep.subr.bf16.mxu0 0
    %537 = vmatpush1.bf16.msra.mxu0 0
    %538 = vmatprep.subr.bf16.mxu0 0
    %539 = vmatpush1.bf16.msra.mxu0 0
    %540 = vmatprep.subr.bf16.mxu0 0
    %541 = vmatpush1.bf16.msra.mxu0 0
    %542 = vmatprep.subr.bf16.mxu0 0
    %543 = vmatpush1.bf16.msra.mxu0 0
    %544 = vmatprep.subr.bf16.mxu0 0
    %545 = vmatpush1.bf16.msra.mxu0 0
    %546 = vmatprep.subr.bf16.mxu0 0
    %547 = vmatpush1.bf16.msra.mxu0 0
    %548 = vmatprep.subr.bf16.mxu0 0
    %549 = vmatpush1.bf16.msra.mxu0 0
    %550 = vmatprep.subr.bf16.mxu0 0
    %551 = vmatpush1.bf16.msra.mxu0 0
    %552 = vmatprep.subr.bf16.mxu0 0
    %553 = vmatpush1.bf16.msra.mxu0 0
    %554 = vmatprep.subr.bf16.mxu0 0
    %555 = vmatpush1.bf16.msra.mxu0 0
    %556 = vmatprep.subr.bf16.mxu0 0
    %557 = vmatpush1.bf16.msra.mxu0 0
    %558 = vmatprep.subr.bf16.mxu0 0
    %559 = vmatpush1.bf16.msra.mxu0 0
    %560 = vmatprep.subr.bf16.mxu0 0
    %561 = vmatpush1.bf16.msra.mxu0 0
    %562 = vmatprep.mubr.bf16.mxu0 0
    %563 = vmatmul.mubr.bf16.gmra.mrb[0].mxu0 %v525
    %v564 = vpop.f32.mrb[0].mxu0
    %v565 = vadd.f32 0.0, %v564
    %v566 = vpop.f32.mrb[0].mxu0
    %v567 = vpop.f32.mrb[0].mxu0
    %v568 = vpop.f32.mrb[0].mxu0
    %569 = vdwg.mxu0
    %570 = vrot.lane.b32.xlu0 %v175, 56
    %v571 = vpop.permute.xlu0 %570
    %v573 = vsel %vm179, %v521, 0
    %v576 = vsel %vm304, %v571, 0
    %578 = vmatprep.subr.bf16.mxu0 0
    %579 = vmatpush1.bf16.msra.mxu0 %v576
    %580 = vmatprep.subr.bf16.mxu0 0
    %581 = vmatpush1.bf16.msra.mxu0 0
    %582 = vmatprep.subr.bf16.mxu0 0
    %583 = vmatpush1.bf16.msra.mxu0 0
    %584 = vmatprep.subr.bf16.mxu0 0
    %585 = vmatpush1.bf16.msra.mxu0 0
    %586 = vmatprep.subr.bf16.mxu0 0
    %587 = vmatpush1.bf16.msra.mxu0 0
    %588 = vmatprep.subr.bf16.mxu0 0
    %589 = vmatpush1.bf16.msra.mxu0 0
    %590 = vmatprep.subr.bf16.mxu0 0
    %591 = vmatpush1.bf16.msra.mxu0 0
    %592 = vmatprep.subr.bf16.mxu0 0
    %593 = vmatpush1.bf16.msra.mxu0 0
    %594 = vmatprep.subr.bf16.mxu0 0
    %595 = vmatpush1.bf16.msra.mxu0 0
    %596 = vmatprep.subr.bf16.mxu0 0
    %597 = vmatpush1.bf16.msra.mxu0 0
    %598 = vmatprep.subr.bf16.mxu0 0
    %599 = vmatpush1.bf16.msra.mxu0 0
    %600 = vmatprep.subr.bf16.mxu0 0
    %601 = vmatpush1.bf16.msra.mxu0 0
    %602 = vmatprep.subr.bf16.mxu0 0
    %603 = vmatpush1.bf16.msra.mxu0 0
    %604 = vmatprep.subr.bf16.mxu0 0
    %605 = vmatpush1.bf16.msra.mxu0 0
    %606 = vmatprep.subr.bf16.mxu0 0
    %607 = vmatpush1.bf16.msra.mxu0 0
    %608 = vmatprep.subr.bf16.mxu0 0
    %609 = vmatpush1.bf16.msra.mxu0 0
    %610 = vmatprep.mubr.bf16.mxu0 0
    %611 = vmatmul.mubr.bf16.gmra.mrb[0].mxu0 %v573
    %v612 = vpop.f32.mrb[0].mxu0
    %v613 = vadd.f32 0.0, %v612
    %v614 = vpop.f32.mrb[0].mxu0
    %v615 = vpop.f32.mrb[0].mxu0
    %v616 = vpop.f32.mrb[0].mxu0
    %617 = vdwg.mxu0
    %618 = vrot.lane.b32.xlu0 %v172, 112
    %v619 = vpop.permute.xlu0 %618
    %620 = vrot.lane.b32.xlu0 %v174, 80
    %v621 = vpop.permute.xlu0 %620
    %v623 = vsel %vm179, %v619, 0
    %v626 = vsel %vm179, %v621, 0
    %628 = vmatprep.subr.bf16.mxu0 0
    %629 = vmatpush1.bf16.xpose.msra.mxu0 %v626
    %630 = vmatprep.subr.bf16.mxu0 0
    %631 = vmatpush1.bf16.xpose.msra.mxu0 0
    %632 = vmatprep.subr.bf16.mxu0 0
    %633 = vmatpush1.bf16.xpose.msra.mxu0 0
    %634 = vmatprep.subr.bf16.mxu0 0
    %635 = vmatpush1.bf16.xpose.msra.mxu0 0
    %636 = vmatprep.subr.bf16.mxu0 0
    %637 = vmatpush1.bf16.xpose.msra.mxu0 0
    %638 = vmatprep.subr.bf16.mxu0 0
    %639 = vmatpush1.bf16.xpose.msra.mxu0 0
    %640 = vmatprep.subr.bf16.mxu0 0
    %641 = vmatpush1.bf16.xpose.msra.mxu0 0
    %642 = vmatprep.subr.bf16.mxu0 0
    %643 = vmatpush1.bf16.xpose.msra.mxu0 0
    %644 = vmatprep.subr.bf16.mxu0 0
    %645 = vmatpush1.bf16.xpose.msra.mxu0 0
    %646 = vmatprep.subr.bf16.mxu0 0
    %647 = vmatpush1.bf16.xpose.msra.mxu0 0
    %648 = vmatprep.subr.bf16.mxu0 0
    %649 = vmatpush1.bf16.xpose.msra.mxu0 0
    %650 = vmatprep.subr.bf16.mxu0 0
    %651 = vmatpush1.bf16.xpose.msra.mxu0 0
    %652 = vmatprep.subr.bf16.mxu0 0
    %653 = vmatpush1.bf16.xpose.msra.mxu0 0
    %654 = vmatprep.subr.bf16.mxu0 0
    %655 = vmatpush1.bf16.xpose.msra.mxu0 0
    %656 = vmatprep.subr.bf16.mxu0 0
    %657 = vmatpush1.bf16.xpose.msra.mxu0 0
    %658 = vmatprep.subr.bf16.mxu0 0
    %659 = vmatpush1.bf16.xpose.msra.mxu0 0
    %660 = vmatprep.mubr.bf16.mxu0 0
    %661 = vmatmul.mubr.bf16.gmra.mrb[0].mxu0 %v623
    %v662 = vpop.f32.mrb[0].mxu0
    %v663 = vadd.f32 %v171, %v662
    %v664 = vpop.f32.mrb[0].mxu0
    %v665 = vpop.f32.mrb[0].mxu0
    %v666 = vpop.f32.mrb[0].mxu0
    %667 = vdwg.mxu0
    %668 = vrot.lane.b32.xlu0 %v173, 112
    %v669 = vpop.permute.xlu0 %668
    %670 = vrot.lane.b32.xlu0 %v175, 80
    %v671 = vpop.permute.xlu0 %670
    %v673 = vsel %vm179, %v669, 0
    %v676 = vsel %vm179, %v671, 0
    %678 = vmatprep.subr.bf16.mxu0 0
    %679 = vmatpush1.bf16.xpose.msra.mxu0 %v676
    %680 = vmatprep.subr.bf16.mxu0 0
    %681 = vmatpush1.bf16.xpose.msra.mxu0 0
    %682 = vmatprep.subr.bf16.mxu0 0
    %683 = vmatpush1.bf16.xpose.msra.mxu0 0
    %684 = vmatprep.subr.bf16.mxu0 0
    %685 = vmatpush1.bf16.xpose.msra.mxu0 0
    %686 = vmatprep.subr.bf16.mxu0 0
    %687 = vmatpush1.bf16.xpose.msra.mxu0 0
    %688 = vmatprep.subr.bf16.mxu0 0
    %689 = vmatpush1.bf16.xpose.msra.mxu0 0
    %690 = vmatprep.subr.bf16.mxu0 0
    %691 = vmatpush1.bf16.xpose.msra.mxu0 0
    %692 = vmatprep.subr.bf16.mxu0 0
    %693 = vmatpush1.bf16.xpose.msra.mxu0 0
    %694 = vmatprep.subr.bf16.mxu0 0
    %695 = vmatpush1.bf16.xpose.msra.mxu0 0
    %696 = vmatprep.subr.bf16.mxu0 0
    %697 = vmatpush1.bf16.xpose.msra.mxu0 0
    %698 = vmatprep.subr.bf16.mxu0 0
    %699 = vmatpush1.bf16.xpose.msra.mxu0 0
    %700 = vmatprep.subr.bf16.mxu0 0
    %701 = vmatpush1.bf16.xpose.msra.mxu0 0
    %702 = vmatprep.subr.bf16.mxu0 0
    %703 = vmatpush1.bf16.xpose.msra.mxu0 0
    %704 = vmatprep.subr.bf16.mxu0 0
    %705 = vmatpush1.bf16.xpose.msra.mxu0 0
    %706 = vmatprep.subr.bf16.mxu0 0
    %707 = vmatpush1.bf16.xpose.msra.mxu0 0
    %708 = vmatprep.subr.bf16.mxu0 0
    %709 = vmatpush1.bf16.xpose.msra.mxu0 0
    %710 = vmatprep.mubr.bf16.mxu0 0
    %711 = vmatmul.mubr.bf16.gmra.mrb[0].mxu0 %v673
    %v712 = vpop.f32.mrb[0].mxu0
    %v713 = vadd.f32 %v171, %v712
    %v714 = vpop.f32.mrb[0].mxu0
    %v715 = vpop.f32.mrb[0].mxu0
    %v716 = vpop.f32.mrb[0].mxu0
    %717 = vdwg.mxu0
    %v718 = vsel %vm179, %v663, -inf
    %719 = vmax.xlane.f32.xlu0 %v718
    %v720 = vpop.xlane.xlu0 %719
    %v721 = vsel %vm179, %v713, -inf
    %722 = vmax.xlane.f32.xlu0 %v721
    %v723 = vpop.xlane.xlu0 %722
    %v724 = vsub.f32 %v663, %v720
    %v725 = vsub.f32 %v713, %v723
    %v726 = vmul.f32 %v724, 1.442695
    %v727 = vpow.pop %v726
    %v728 = vmul.f32 %v725, 1.442695
    %v729 = vpow.pop %v728
    %v730 = vsel %vm179, %v727, 0.0
    %731 = vadd.xlane.f32.xlu0 %v730
    %v732 = vpop.xlane.xlu0 %731
    %v733 = vsel %vm179, %v729, 0.0
    %734 = vadd.xlane.f32.xlu0 %v733
    %v735 = vpop.xlane.xlu0 %734
    %v736 = vrcp.pop %v732
    %v737 = vrcp.pop %v735
    %v738 = vmul.f32 %v727, %v736
    %v739 = vmul.f32 %v729, %v737
    %v740 = vpack.c.bf16 %v738, %v738
    %v741 = vpack.c.bf16 %v739, %v739
    %742 = vrot.lane.b32.xlu0 %v174, 48
    %v743 = vpop.permute.xlu0 %742
    %v745 = vsel %vm179, %v740, 0
    %v748 = vsel %vm304, %v743, 0
    %750 = vmatprep.subr.bf16.mxu0 0
    %751 = vmatpush1.bf16.msra.mxu0 %v748
    %752 = vmatprep.subr.bf16.mxu0 0
    %753 = vmatpush1.bf16.msra.mxu0 0
    %754 = vmatprep.subr.bf16.mxu0 0
    %755 = vmatpush1.bf16.msra.mxu0 0
    %756 = vmatprep.subr.bf16.mxu0 0
    %757 = vmatpush1.bf16.msra.mxu0 0
    %758 = vmatprep.subr.bf16.mxu0 0
    %759 = vmatpush1.bf16.msra.mxu0 0
    %760 = vmatprep.subr.bf16.mxu0 0
    %761 = vmatpush1.bf16.msra.mxu0 0
    %762 = vmatprep.subr.bf16.mxu0 0
    %763 = vmatpush1.bf16.msra.mxu0 0
    %764 = vmatprep.subr.bf16.mxu0 0
    %765 = vmatpush1.bf16.msra.mxu0 0
    %766 = vmatprep.subr.bf16.mxu0 0
    %767 = vmatpush1.bf16.msra.mxu0 0
    %768 = vmatprep.subr.bf16.mxu0 0
    %769 = vmatpush1.bf16.msra.mxu0 0
    %770 = vmatprep.subr.bf16.mxu0 0
    %771 = vmatpush1.bf16.msra.mxu0 0
    %772 = vmatprep.subr.bf16.mxu0 0
    %773 = vmatpush1.bf16.msra.mxu0 0
    %774 = vmatprep.subr.bf16.mxu0 0
    %775 = vmatpush1.bf16.msra.mxu0 0
    %776 = vmatprep.subr.bf16.mxu0 0
    %777 = vmatpush1.bf16.msra.mxu0 0
    %778 = vmatprep.subr.bf16.mxu0 0
    %779 = vmatpush1.bf16.msra.mxu0 0
    %780 = vmatprep.subr.bf16.mxu0 0
    %781 = vmatpush1.bf16.msra.mxu0 0
    %782 = vmatprep.mubr.bf16.mxu0 0
    %783 = vmatmul.mubr.bf16.gmra.mrb[0].mxu0 %v745
    %v784 = vpop.f32.mrb[0].mxu0
    %v785 = vadd.f32 0.0, %v784
    %v786 = vpop.f32.mrb[0].mxu0
    %v787 = vpop.f32.mrb[0].mxu0
    %v788 = vpop.f32.mrb[0].mxu0
    %789 = vdwg.mxu0
    %790 = vrot.lane.b32.xlu0 %v175, 48
    %v791 = vpop.permute.xlu0 %790
    %v793 = vsel %vm179, %v741, 0
    %v796 = vsel %vm304, %v791, 0
    %798 = vmatprep.subr.bf16.mxu0 0
    %799 = vmatpush1.bf16.msra.mxu0 %v796
    %800 = vmatprep.subr.bf16.mxu0 0
    %801 = vmatpush1.bf16.msra.mxu0 0
    %802 = vmatprep.subr.bf16.mxu0 0
    %803 = vmatpush1.bf16.msra.mxu0 0
    %804 = vmatprep.subr.bf16.mxu0 0
    %805 = vmatpush1.bf16.msra.mxu0 0
    %806 = vmatprep.subr.bf16.mxu0 0
    %807 = vmatpush1.bf16.msra.mxu0 0
    %808 = vmatprep.subr.bf16.mxu0 0
    %809 = vmatpush1.bf16.msra.mxu0 0
    %810 = vmatprep.subr.bf16.mxu0 0
    %811 = vmatpush1.bf16.msra.mxu0 0
    %812 = vmatprep.subr.bf16.mxu0 0
    %813 = vmatpush1.bf16.msra.mxu0 0
    %814 = vmatprep.subr.bf16.mxu0 0
    %815 = vmatpush1.bf16.msra.mxu0 0
    %816 = vmatprep.subr.bf16.mxu0 0
    %817 = vmatpush1.bf16.msra.mxu0 0
    %818 = vmatprep.subr.bf16.mxu0 0
    %819 = vmatpush1.bf16.msra.mxu0 0
    %820 = vmatprep.subr.bf16.mxu0 0
    %821 = vmatpush1.bf16.msra.mxu0 0
    %822 = vmatprep.subr.bf16.mxu0 0
    %823 = vmatpush1.bf16.msra.mxu0 0
    %824 = vmatprep.subr.bf16.mxu0 0
    %825 = vmatpush1.bf16.msra.mxu0 0
    %826 = vmatprep.subr.bf16.mxu0 0
    %827 = vmatpush1.bf16.msra.mxu0 0
    %828 = vmatprep.subr.bf16.mxu0 0
    %829 = vmatpush1.bf16.msra.mxu0 0
    %830 = vmatprep.mubr.bf16.mxu0 0
    %831 = vmatmul.mubr.bf16.gmra.mrb[0].mxu0 %v793
    %v832 = vpop.f32.mrb[0].mxu0
    %v833 = vadd.f32 0.0, %v832
    %v834 = vpop.f32.mrb[0].mxu0
    %v835 = vpop.f32.mrb[0].mxu0
    %v836 = vpop.f32.mrb[0].mxu0
    %837 = vdwg.mxu0
    %838 = vrot.lane.b32.xlu0 %v172, 104
    %v839 = vpop.permute.xlu0 %838
    %840 = vrot.lane.b32.xlu0 %v174, 72
    %v841 = vpop.permute.xlu0 %840
    %v843 = vsel %vm179, %v839, 0
    %v846 = vsel %vm179, %v841, 0
    %848 = vmatprep.subr.bf16.mxu0 0
    %849 = vmatpush1.bf16.xpose.msra.mxu0 %v846
    %850 = vmatprep.subr.bf16.mxu0 0
    %851 = vmatpush1.bf16.xpose.msra.mxu0 0
    %852 = vmatprep.subr.bf16.mxu0 0
    %853 = vmatpush1.bf16.xpose.msra.mxu0 0
    %854 = vmatprep.subr.bf16.mxu0 0
    %855 = vmatpush1.bf16.xpose.msra.mxu0 0
    %856 = vmatprep.subr.bf16.mxu0 0
    %857 = vmatpush1.bf16.xpose.msra.mxu0 0
    %858 = vmatprep.subr.bf16.mxu0 0
    %859 = vmatpush1.bf16.xpose.msra.mxu0 0
    %860 = vmatprep.subr.bf16.mxu0 0
    %861 = vmatpush1.bf16.xpose.msra.mxu0 0
    %862 = vmatprep.subr.bf16.mxu0 0
    %863 = vmatpush1.bf16.xpose.msra.mxu0 0
    %864 = vmatprep.subr.bf16.mxu0 0
    %865 = vmatpush1.bf16.xpose.msra.mxu0 0
    %866 = vmatprep.subr.bf16.mxu0 0
    %867 = vmatpush1.bf16.xpose.msra.mxu0 0
    %868 = vmatprep.subr.bf16.mxu0 0
    %869 = vmatpush1.bf16.xpose.msra.mxu0 0
    %870 = vmatprep.subr.bf16.mxu0 0
    %871 = vmatpush1.bf16.xpose.msra.mxu0 0
    %872 = vmatprep.subr.bf16.mxu0 0
    %873 = vmatpush1.bf16.xpose.msra.mxu0 0
    %874 = vmatprep.subr.bf16.mxu0 0
    %875 = vmatpush1.bf16.xpose.msra.mxu0 0
    %876 = vmatprep.subr.bf16.mxu0 0
    %877 = vmatpush1.bf16.xpose.msra.mxu0 0
    %878 = vmatprep.subr.bf16.mxu0 0
    %879 = vmatpush1.bf16.xpose.msra.mxu0 0
    %880 = vmatprep.mubr.bf16.mxu0 0
    %881 = vmatmul.mubr.bf16.gmra.mrb[0].mxu0 %v843
    %v882 = vpop.f32.mrb[0].mxu0
    %v883 = vadd.f32 %v171, %v882
    %v884 = vpop.f32.mrb[0].mxu0
    %v885 = vpop.f32.mrb[0].mxu0
    %v886 = vpop.f32.mrb[0].mxu0
    %887 = vdwg.mxu0
    %888 = vrot.lane.b32.xlu0 %v173, 104
    %v889 = vpop.permute.xlu0 %888
    %890 = vrot.lane.b32.xlu0 %v175, 72
    %v891 = vpop.permute.xlu0 %890
    %v893 = vsel %vm179, %v889, 0
    %v896 = vsel %vm179, %v891, 0
    %898 = vmatprep.subr.bf16.mxu0 0
    %899 = vmatpush1.bf16.xpose.msra.mxu0 %v896
    %900 = vmatprep.subr.bf16.mxu0 0
    %901 = vmatpush1.bf16.xpose.msra.mxu0 0
    %902 = vmatprep.subr.bf16.mxu0 0
    %903 = vmatpush1.bf16.xpose.msra.mxu0 0
    %904 = vmatprep.subr.bf16.mxu0 0
    %905 = vmatpush1.bf16.xpose.msra.mxu0 0
    %906 = vmatprep.subr.bf16.mxu0 0
    %907 = vmatpush1.bf16.xpose.msra.mxu0 0
    %908 = vmatprep.subr.bf16.mxu0 0
    %909 = vmatpush1.bf16.xpose.msra.mxu0 0
    %910 = vmatprep.subr.bf16.mxu0 0
    %911 = vmatpush1.bf16.xpose.msra.mxu0 0
    %912 = vmatprep.subr.bf16.mxu0 0
    %913 = vmatpush1.bf16.xpose.msra.mxu0 0
    %914 = vmatprep.subr.bf16.mxu0 0
    %915 = vmatpush1.bf16.xpose.msra.mxu0 0
    %916 = vmatprep.subr.bf16.mxu0 0
    %917 = vmatpush1.bf16.xpose.msra.mxu0 0
    %918 = vmatprep.subr.bf16.mxu0 0
    %919 = vmatpush1.bf16.xpose.msra.mxu0 0
    %920 = vmatprep.subr.bf16.mxu0 0
    %921 = vmatpush1.bf16.xpose.msra.mxu0 0
    %922 = vmatprep.subr.bf16.mxu0 0
    %923 = vmatpush1.bf16.xpose.msra.mxu0 0
    %924 = vmatprep.subr.bf16.mxu0 0
    %925 = vmatpush1.bf16.xpose.msra.mxu0 0
    %926 = vmatprep.subr.bf16.mxu0 0
    %927 = vmatpush1.bf16.xpose.msra.mxu0 0
    %928 = vmatprep.subr.bf16.mxu0 0
    %929 = vmatpush1.bf16.xpose.msra.mxu0 0
    %930 = vmatprep.mubr.bf16.mxu0 0
    %931 = vmatmul.mubr.bf16.gmra.mrb[0].mxu0 %v893
    %v932 = vpop.f32.mrb[0].mxu0
    %v933 = vadd.f32 %v171, %v932
    %v934 = vpop.f32.mrb[0].mxu0
    %v935 = vpop.f32.mrb[0].mxu0
    %v936 = vpop.f32.mrb[0].mxu0
    %937 = vdwg.mxu0
    %v938 = vsel %vm179, %v883, -inf
    %939 = vmax.xlane.f32.xlu0 %v938
    %v940 = vpop.xlane.xlu0 %939
    %v941 = vsel %vm179, %v933, -inf
    %942 = vmax.xlane.f32.xlu0 %v941
    %v943 = vpop.xlane.xlu0 %942
    %v944 = vsub.f32 %v883, %v940
    %v945 = vsub.f32 %v933, %v943
    %v946 = vmul.f32 %v944, 1.442695
    %v947 = vpow.pop %v946
    %v948 = vmul.f32 %v945, 1.442695
    %v949 = vpow.pop %v948
    %v950 = vsel %vm179, %v947, 0.0
    %951 = vadd.xlane.f32.xlu0 %v950
    %v952 = vpop.xlane.xlu0 %951
    %v953 = vsel %vm179, %v949, 0.0
    %954 = vadd.xlane.f32.xlu0 %v953
    %v955 = vpop.xlane.xlu0 %954
    %v956 = vrcp.pop %v952
    %v957 = vrcp.pop %v955
    %v958 = vmul.f32 %v947, %v956
    %v959 = vmul.f32 %v949, %v957
    %v960 = vpack.c.bf16 %v958, %v958
    %v961 = vpack.c.bf16 %v959, %v959
    %962 = vrot.lane.b32.xlu0 %v174, 40
    %v963 = vpop.permute.xlu0 %962
    %v965 = vsel %vm179, %v960, 0
    %v968 = vsel %vm304, %v963, 0
    %970 = vmatprep.subr.bf16.mxu0 0
    %971 = vmatpush1.bf16.msra.mxu0 %v968
    %972 = vmatprep.subr.bf16.mxu0 0
    %973 = vmatpush1.bf16.msra.mxu0 0
    %974 = vmatprep.subr.bf16.mxu0 0
    %975 = vmatpush1.bf16.msra.mxu0 0
    %976 = vmatprep.subr.bf16.mxu0 0
    %977 = vmatpush1.bf16.msra.mxu0 0
    %978 = vmatprep.subr.bf16.mxu0 0
    %979 = vmatpush1.bf16.msra.mxu0 0
    %980 = vmatprep.subr.bf16.mxu0 0
    %981 = vmatpush1.bf16.msra.mxu0 0
    %982 = vmatprep.subr.bf16.mxu0 0
    %983 = vmatpush1.bf16.msra.mxu0 0
    %984 = vmatprep.subr.bf16.mxu0 0
    %985 = vmatpush1.bf16.msra.mxu0 0
    %986 = vmatprep.subr.bf16.mxu0 0
    %987 = vmatpush1.bf16.msra.mxu0 0
    %988 = vmatprep.subr.bf16.mxu0 0
    %989 = vmatpush1.bf16.msra.mxu0 0
    %990 = vmatprep.subr.bf16.mxu0 0
    %991 = vmatpush1.bf16.msra.mxu0 0
    %992 = vmatprep.subr.bf16.mxu0 0
    %993 = vmatpush1.bf16.msra.mxu0 0
    %994 = vmatprep.subr.bf16.mxu0 0
    %995 = vmatpush1.bf16.msra.mxu0 0
    %996 = vmatprep.subr.bf16.mxu0 0
    %997 = vmatpush1.bf16.msra.mxu0 0
    %998 = vmatprep.subr.bf16.mxu0 0
    %999 = vmatpush1.bf16.msra.mxu0 0
    %1000 = vmatprep.subr.bf16.mxu0 0
    %1001 = vmatpush1.bf16.msra.mxu0 0
    %1002 = vmatprep.mubr.bf16.mxu0 0
    %1003 = vmatmul.mubr.bf16.gmra.mrb[0].mxu0 %v965
    %v1004 = vpop.f32.mrb[0].mxu0
    %v1005 = vadd.f32 0.0, %v1004
    %v1006 = vpop.f32.mrb[0].mxu0
    %v1007 = vpop.f32.mrb[0].mxu0
    %v1008 = vpop.f32.mrb[0].mxu0
    %1009 = vdwg.mxu0
    %1010 = vrot.lane.b32.xlu0 %v175, 40
    %v1011 = vpop.permute.xlu0 %1010
    %v1013 = vsel %vm179, %v961, 0
    %v1016 = vsel %vm304, %v1011, 0
    %1018 = vmatprep.subr.bf16.mxu0 0
    %1019 = vmatpush1.bf16.msra.mxu0 %v1016
    %1020 = vmatprep.subr.bf16.mxu0 0
    %1021 = vmatpush1.bf16.msra.mxu0 0
    %1022 = vmatprep.subr.bf16.mxu0 0
    %1023 = vmatpush1.bf16.msra.mxu0 0
    %1024 = vmatprep.subr.bf16.mxu0 0
    %1025 = vmatpush1.bf16.msra.mxu0 0
    %1026 = vmatprep.subr.bf16.mxu0 0
    %1027 = vmatpush1.bf16.msra.mxu0 0
    %1028 = vmatprep.subr.bf16.mxu0 0
    %1029 = vmatpush1.bf16.msra.mxu0 0
    %1030 = vmatprep.subr.bf16.mxu0 0
    %1031 = vmatpush1.bf16.msra.mxu0 0
    %1032 = vmatprep.subr.bf16.mxu0 0
    %1033 = vmatpush1.bf16.msra.mxu0 0
    %1034 = vmatprep.subr.bf16.mxu0 0
    %1035 = vmatpush1.bf16.msra.mxu0 0
    %1036 = vmatprep.subr.bf16.mxu0 0
    %1037 = vmatpush1.bf16.msra.mxu0 0
    %1038 = vmatprep.subr.bf16.mxu0 0
    %1039 = vmatpush1.bf16.msra.mxu0 0
    %1040 = vmatprep.subr.bf16.mxu0 0
    %1041 = vmatpush1.bf16.msra.mxu0 0
    %1042 = vmatprep.subr.bf16.mxu0 0
    %1043 = vmatpush1.bf16.msra.mxu0 0
    %1044 = vmatprep.subr.bf16.mxu0 0
    %1045 = vmatpush1.bf16.msra.mxu0 0
    %1046 = vmatprep.subr.bf16.mxu0 0
    %1047 = vmatpush1.bf16.msra.mxu0 0
    %1048 = vmatprep.subr.bf16.mxu0 0
    %1049 = vmatpush1.bf16.msra.mxu0 0
    %1050 = vmatprep.mubr.bf16.mxu0 0
    %1051 = vmatmul.mubr.bf16.gmra.mrb[0].mxu0 %v1013
    %v1052 = vpop.f32.mrb[0].mxu0
    %v1053 = vadd.f32 0.0, %v1052
    %v1054 = vpop.f32.mrb[0].mxu0
    %v1055 = vpop.f32.mrb[0].mxu0
    %v1056 = vpop.f32.mrb[0].mxu0
    %1057 = vdwg.mxu0
    %1060 = vrot.lane.b32.xlu0 %v565, 8
    %v1061 = vpop.permute.xlu0 %1060
    %1062 = vrot.lane.b32.xlu0 %v613, 8
    %v1063 = vpop.permute.xlu0 %1062
    %1068 = vrot.lane.b32.xlu0 %v785, 16
    %v1069 = vpop.permute.xlu0 %1068
    %1070 = vrot.lane.b32.xlu0 %v833, 16
    %v1071 = vpop.permute.xlu0 %1070
    %1076 = vrot.lane.b32.xlu0 %v1005, 24
    %v1077 = vpop.permute.xlu0 %1076
    %1078 = vrot.lane.b32.xlu0 %v1053, 24
    %v1079 = vpop.permute.xlu0 %1078
    %v1082 = vsel %vm179, %v343, %v1061
    %v1083 = vsel %vm179, %v391, %v1063
    %vm1084 = vcmask 130048
    %v1085 = vsel %vm1084, %v1082, %v1069
    %v1086 = vsel %vm1084, %v1083, %v1071
    %vm1087 = vcmask 195584
    %v1088 = vsel %vm1087, %v1085, %v1077
    %v1089 = vsel %vm1087, %v1086, %v1079
    %v1090 = vpack.c.bf16 %v1089, %v1088
    %v1091 = vld [vmem:[%s5] sm:$0xf]
    %v1092 = vld [vmem:[%s5 + $0x4] sm:$0xf]
    %v1093 = vld [vmem:[%s5 + $0x8] sm:$0xf]
    %v1094 = vld [vmem:[%s5 + $0xc] sm:$0xf]
    %v1095 = vld [vmem:[%s6] sm:$0x1]
    %v1097 = vlaneseq
    %v1098 = vshrl.u32 %v1097, 7
    %v1099 = vsub.s32 0, %v1098
    %v1100 = vrot.slane %v1095, %v1099
    %v1106 = vunpack.c.l.b16 %v1091
    %v1107 = vunpack.c.l.b16 %v1092
    %v1108 = vunpack.c.l.b16 %v1093
    %v1109 = vunpack.c.l.b16 %v1094
    %v1110 = vpack.c.b16 %v1107, %v1106
    %v1111 = vpack.c.b16 %v1109, %v1108
    %v1115 = vsel %vm52, %v1090, 0
    %1117 = vmatprep.subr.bf16.mxu0 0
    %1118 = vmatpush1.bf16.msra.mxu0 %v1110
    %1119 = vmatprep.subr.bf16.mxu0 0
    %1120 = vmatpush1.bf16.msra.mxu0 %v1111
    %1121 = vmatprep.subr.bf16.mxu0 0
    %1122 = vmatpush1.bf16.msra.mxu0 0
    %1123 = vmatprep.subr.bf16.mxu0 0
    %1124 = vmatpush1.bf16.msra.mxu0 0
    %1125 = vmatprep.subr.bf16.mxu0 0
    %1126 = vmatpush1.bf16.msra.mxu0 0
    %1127 = vmatprep.subr.bf16.mxu0 0
    %1128 = vmatpush1.bf16.msra.mxu0 0
    %1129 = vmatprep.subr.bf16.mxu0 0
    %1130 = vmatpush1.bf16.msra.mxu0 0
    %1131 = vmatprep.subr.bf16.mxu0 0
    %1132 = vmatpush1.bf16.msra.mxu0 0
    %1133 = vmatprep.subr.bf16.mxu0 0
    %1134 = vmatpush1.bf16.msra.mxu0 0
    %1135 = vmatprep.subr.bf16.mxu0 0
    %1136 = vmatpush1.bf16.msra.mxu0 0
    %1137 = vmatprep.subr.bf16.mxu0 0
    %1138 = vmatpush1.bf16.msra.mxu0 0
    %1139 = vmatprep.subr.bf16.mxu0 0
    %1140 = vmatpush1.bf16.msra.mxu0 0
    %1141 = vmatprep.subr.bf16.mxu0 0
    %1142 = vmatpush1.bf16.msra.mxu0 0
    %1143 = vmatprep.subr.bf16.mxu0 0
    %1144 = vmatpush1.bf16.msra.mxu0 0
    %1145 = vmatprep.subr.bf16.mxu0 0
    %1146 = vmatpush1.bf16.msra.mxu0 0
    %1147 = vmatprep.subr.bf16.mxu0 0
    %1148 = vmatpush1.bf16.msra.mxu0 0
    %1149 = vmatprep.mubr.bf16.mxu0 0
    %1150 = vmatmul.mubr.bf16.gmra.mrb[0].mxu0 %v1115
    %v1151 = vpop.f32.mrb[0].mxu0
    %v1152 = vadd.f32 %v1100, %v1151
    %v1153 = vpop.f32.mrb[0].mxu0
    %v1154 = vpop.f32.mrb[0].mxu0
    %v1155 = vadd.f32 %v1100, %v1154
    %v1156 = vpop.f32.mrb[0].mxu0
    %1157 = vdwg.mxu0
    %v1158 = vadd.f32 %v48, %v1152
    %v1159 = vadd.f32 %v49, %v1155
    %v1160 = vld [vmem:[%s7] sm:$0x1]
    %v1161 = vld [vmem:[%s8] sm:$0x1]
    %v1162 = vsel %vm52, %v1158, 0.0
    %1163 = vadd.xlane.f32.xlu0 %v1162
    %v1164 = vpop.xlane.xlu0 %1163
    %v1165 = vsel %vm52, %v1159, 0.0
    %1166 = vadd.xlane.f32.xlu0 %v1165
    %v1167 = vpop.xlane.xlu0 %1166
    %v1168 = vmul.f32 %v1164, %v59
    %v1169 = vmul.f32 %v1167, %v59
    %v1170 = vsub.f32 %v1158, %v1168
    %v1171 = vsub.f32 %v1159, %v1169
    %v1172 = vmul.f32 %v1170, %v1170
    %v1173 = vmul.f32 %v1171, %v1171
    %v1174 = vsel %vm52, %v1172, 0.0
    %1175 = vadd.xlane.f32.xlu0 %v1174
    %v1176 = vpop.xlane.xlu0 %1175
    %v1177 = vsel %vm52, %v1173, 0.0
    %1178 = vadd.xlane.f32.xlu0 %v1177
    %v1179 = vpop.xlane.xlu0 %1178
    %v1180 = vmul.f32 %v1176, %v59
    %v1181 = vmul.f32 %v1179, %v59
    %v1182 = vadd.f32 %v1180, 1e-05
    %v1183 = vadd.f32 %v1181, 1e-05
    %v1184 = vrsqrt.pop %v1182
    %v1185 = vrsqrt.pop %v1183
    %v1186 = vmul.f32 %v1170, %v1184
    %v1187 = vmul.f32 %v1171, %v1185
    %v1189 = vlaneseq
    %v1190 = vshrl.u32 %v1189, 7
    %v1191 = vsub.s32 0, %v1190
    %v1192 = vrot.slane %v1160, %v1191
    %v1194 = vmul.f32 %v1186, %v1192
    %v1195 = vmul.f32 %v1187, %v1192
    %v1197 = vlaneseq
    %v1198 = vshrl.u32 %v1197, 7
    %v1199 = vsub.s32 0, %v1198
    %v1200 = vrot.slane %v1161, %v1199
    %v1202 = vadd.f32 %v1194, %v1200
    %v1203 = vadd.f32 %v1195, %v1200
    %v1204 = vpack.c.bf16 %v1203, %v1202
    %v1205 = vld [vmem:[%s9] sm:$0xf]
    %v1206 = vld [vmem:[%s9 + $0x4] sm:$0xf]
    %v1207 = vld [vmem:[%s9 + $0x8] sm:$0xf]
    %v1208 = vld [vmem:[%s9 + $0xc] sm:$0xf]
    %v1209 = vld [vmem:[%s10] sm:$0x1]
    %v1211 = vlaneseq
    %v1212 = vshrl.u32 %v1211, 7
    %v1213 = vsub.s32 0, %v1212
    %v1214 = vrot.slane %v1209, %v1213
    %v1220 = vunpack.c.l.b16 %v1205
    %v1221 = vunpack.c.l.b16 %v1206
    %v1222 = vunpack.c.l.b16 %v1207
    %v1223 = vunpack.c.l.b16 %v1208
    %v1224 = vpack.c.b16 %v1221, %v1220
    %v1225 = vpack.c.b16 %v1223, %v1222
    %v1229 = vsel %vm52, %v1204, 0
    %1231 = vmatprep.subr.bf16.mxu0 0
    %1232 = vmatpush1.bf16.msra.mxu0 %v1224
    %1233 = vmatprep.subr.bf16.mxu0 0
    %1234 = vmatpush1.bf16.msra.mxu0 %v1225
    %1235 = vmatprep.subr.bf16.mxu0 0
    %1236 = vmatpush1.bf16.msra.mxu0 0
    %1237 = vmatprep.subr.bf16.mxu0 0
    %1238 = vmatpush1.bf16.msra.mxu0 0
    %1239 = vmatprep.subr.bf16.mxu0 0
    %1240 = vmatpush1.bf16.msra.mxu0 0
    %1241 = vmatprep.subr.bf16.mxu0 0
    %1242 = vmatpush1.bf16.msra.mxu0 0
    %1243 = vmatprep.subr.bf16.mxu0 0
    %1244 = vmatpush1.bf16.msra.mxu0 0
    %1245 = vmatprep.subr.bf16.mxu0 0
    %1246 = vmatpush1.bf16.msra.mxu0 0
    %1247 = vmatprep.subr.bf16.mxu0 0
    %1248 = vmatpush1.bf16.msra.mxu0 0
    %1249 = vmatprep.subr.bf16.mxu0 0
    %1250 = vmatpush1.bf16.msra.mxu0 0
    %1251 = vmatprep.subr.bf16.mxu0 0
    %1252 = vmatpush1.bf16.msra.mxu0 0
    %1253 = vmatprep.subr.bf16.mxu0 0
    %1254 = vmatpush1.bf16.msra.mxu0 0
    %1255 = vmatprep.subr.bf16.mxu0 0
    %1256 = vmatpush1.bf16.msra.mxu0 0
    %1257 = vmatprep.subr.bf16.mxu0 0
    %1258 = vmatpush1.bf16.msra.mxu0 0
    %1259 = vmatprep.subr.bf16.mxu0 0
    %1260 = vmatpush1.bf16.msra.mxu0 0
    %1261 = vmatprep.subr.bf16.mxu0 0
    %1262 = vmatpush1.bf16.msra.mxu0 0
    %1263 = vmatprep.mubr.bf16.mxu0 0
    %1264 = vmatmul.mubr.bf16.gmra.mrb[0].mxu0 %v1229
    %v1265 = vpop.f32.mrb[0].mxu0
    %v1266 = vadd.f32 %v1214, %v1265
    %v1267 = vpop.f32.mrb[0].mxu0
    %v1268 = vpop.f32.mrb[0].mxu0
    %v1269 = vadd.f32 %v1214, %v1268
    %v1270 = vpop.f32.mrb[0].mxu0
    %1271 = vdwg.mxu0
    %v1272 = vmul.f32 %v1266, 1.702
    %v1273 = vmul.f32 %v1269, 1.702
    %v1274 = vxor.u32 %v1272, 2147483648
    %v1275 = vxor.u32 %v1273, 2147483648
    %v1276 = vmul.f32 %v1274, 1.442695
    %v1277 = vpow.pop %v1276
    %v1278 = vmul.f32 %v1275, 1.442695
    %v1279 = vpow.pop %v1278
    %v1280 = vadd.f32 %v1277, 1.0
    %v1281 = vadd.f32 %v1279, 1.0
    %v1282 = vrcp.pop %v1280
    %v1283 = vmul.f32 1.0, %v1282
    %v1284 = vrcp.pop %v1281
    %v1285 = vmul.f32 1.0, %v1284
    %v1286 = vmul.f32 %v1266, %v1283
    %v1287 = vmul.f32 %v1269, %v1285
    %v1288 = vpack.c.bf16 %v1287, %v1286
    %v1289 = vld [vmem:[%s11] sm:$0xf]
    %v1290 = vld [vmem:[%s11 + $0x4] sm:$0xf]
    %v1291 = vld [vmem:[%s11 + $0x8] sm:$0xf]
    %v1292 = vld [vmem:[%s11 + $0xc] sm:$0xf]
    %v1293 = vld [vmem:[%s11 + $0x10] sm:$0xf]
    %v1294 = vld [vmem:[%s11 + $0x14] sm:$0xf]
    %v1295 = vld [vmem:[%s11 + $0x18] sm:$0xf]
    %v1296 = vld [vmem:[%s11 + $0x1c] sm:$0xf]
    %v1297 = vld [vmem:[%s11 + $0x20] sm:$0xf]
    %v1298 = vld [vmem:[%s11 + $0x24] sm:$0xf]
    %v1299 = vld [vmem:[%s11 + $0x28] sm:$0xf]
    %v1300 = vld [vmem:[%s11 + $0x2c] sm:$0xf]
    %v1301 = vld [vmem:[%s11 + $0x30] sm:$0xf]
    %v1302 = vld [vmem:[%s11 + $0x34] sm:$0xf]
    %v1303 = vld [vmem:[%s11 + $0x38] sm:$0xf]
    %v1304 = vld [vmem:[%s11 + $0x3c] sm:$0xf]
    %v1305 = vld [vmem:[%s12] sm:$0x1]
    %v1307 = vlaneseq
    %v1308 = vshrl.u32 %v1307, 7
    %v1309 = vsub.s32 0, %v1308
    %v1310 = vrot.slane %v1305, %v1309
    %v1328 = vunpack.c.l.b16 %v1289
    %v1329 = vunpack.c.l.b16 %v1290
    %v1330 = vunpack.c.l.b16 %v1291
    %v1331 = vunpack.c.l.b16 %v1292
    %v1332 = vunpack.c.l.b16 %v1293
    %v1333 = vunpack.c.l.b16 %v1294
    %v1334 = vunpack.c.l.b16 %v1295
    %v1335 = vunpack.c.l.b16 %v1296
    %v1336 = vunpack.c.l.b16 %v1297
    %v1337 = vunpack.c.l.b16 %v1298
    %v1338 = vunpack.c.l.b16 %v1299
    %v1339 = vunpack.c.l.b16 %v1300
    %v1340 = vunpack.c.l.b16 %v1301
    %v1341 = vunpack.c.l.b16 %v1302
    %v1342 = vunpack.c.l.b16 %v1303
    %v1343 = vunpack.c.l.b16 %v1304
    %v1344 = vpack.c.b16 %v1329, %v1328
    %v1345 = vpack.c.b16 %v1331, %v1330
    %v1346 = vpack.c.b16 %v1333, %v1332
    %v1347 = vpack.c.b16 %v1335, %v1334
    %v1348 = vpack.c.b16 %v1337, %v1336
    %v1349 = vpack.c.b16 %v1339, %v1338
    %v1350 = vpack.c.b16 %v1341, %v1340
    %v1351 = vpack.c.b16 %v1343, %v1342
    %1360 = vmatprep.subr.bf16.mxu0 0
    %1361 = vmatpush1.bf16.msra.mxu0 %v1344
    %1362 = vmatprep.subr.bf16.mxu0 0
    %1363 = vmatpush1.bf16.msra.mxu0 %v1345
    %1364 = vmatprep.subr.bf16.mxu0 0
    %1365 = vmatpush1.bf16.msra.mxu0 %v1346
    %1366 = vmatprep.subr.bf16.mxu0 0
    %1367 = vmatpush1.bf16.msra.mxu0 %v1347
    %1368 = vmatprep.subr.bf16.mxu0 0
    %1369 = vmatpush1.bf16.msra.mxu0 %v1348
    %1370 = vmatprep.subr.bf16.mxu0 0
    %1371 = vmatpush1.bf16.msra.mxu0 %v1349
    %1372 = vmatprep.subr.bf16.mxu0 0
    %1373 = vmatpush1.bf16.msra.mxu0 %v1350
    %1374 = vmatprep.subr.bf16.mxu0 0
    %1375 = vmatpush1.bf16.msra.mxu0 %v1351
    %1376 = vmatprep.subr.bf16.mxu0 0
    %1377 = vmatpush1.bf16.msra.mxu0 0
    %1378 = vmatprep.subr.bf16.mxu0 0
    %1379 = vmatpush1.bf16.msra.mxu0 0
    %1380 = vmatprep.subr.bf16.mxu0 0
    %1381 = vmatpush1.bf16.msra.mxu0 0
    %1382 = vmatprep.subr.bf16.mxu0 0
    %1383 = vmatpush1.bf16.msra.mxu0 0
    %1384 = vmatprep.subr.bf16.mxu0 0
    %1385 = vmatpush1.bf16.msra.mxu0 0
    %1386 = vmatprep.subr.bf16.mxu0 0
    %1387 = vmatpush1.bf16.msra.mxu0 0
    %1388 = vmatprep.subr.bf16.mxu0 0
    %1389 = vmatpush1.bf16.msra.mxu0 0
    %1390 = vmatprep.subr.bf16.mxu0 0
    %1391 = vmatpush1.bf16.msra.mxu0 0
    %1392 = vmatprep.mubr.bf16.mxu0 0
    %1393 = vmatmul.mubr.bf16.gmra.mrb[0].mxu0 %v1288
    %v1394 = vpop.f32.mrb[0].mxu0
    %v1395 = vadd.f32 %v1310, %v1394
    %v1396 = vpop.f32.mrb[0].mxu0
    %v1397 = vpop.f32.mrb[0].mxu0
    %v1398 = vadd.f32 %v1310, %v1397
    %v1399 = vpop.f32.mrb[0].mxu0
    %1400 = vdwg.mxu0
    %v1401 = vadd.f32 %v1158, %v1395
    %v1402 = vadd.f32 %v1159, %v1398
    %v1403 = vpack.c.bf16 %v1401, %v1401
    %v1404 = vpack.c.bf16 %v1402, %v1402
    %vm1405 = vcmask 257024
    %1406 = vst.msk [vmem:[#allocation2] sm:$0xf] %vm1405, %v1403
    %1407 = vst.msk [vmem:[#allocation2 + $0x4] sm:$0xf] %vm1405, %v1404
    // Predicated region
    $region54: #{tpu_custom_call.1} parent=1 // pred_check
      _
    $region55: #{tpu_custom_call.1} parent=1 // pred_check_branch
      %1409 = sbr.rel (0) target = $region57
    $region56: #{tpu_custom_call.1} parent=1 // pred_region
      %s1411 = ssub.s32 128, 128
      %1412 = vsyncadd [#allocation3], %s1411
      %s1413 = sshll.u32 [#allocation2], 4
      %s1414 = int_to_ptr.vmem [resolvable:$true] %s1413
      %1419 = dma.vmem_to_hbm [thread:$0]  %s1414, 128, %s13, [#allocation3], 64, 64, 4
    $region57: #{tpu_custom_call.1} parent=1 // pred_fallthru
      _
    // Predicated region
    $region58: #{tpu_custom_call.1} parent=1 // pred_check
      _
    $region59: #{tpu_custom_call.1} parent=1 // pred_check_branch
      %1421 = sbr.rel (0) target = $region61
    $region60: #{tpu_custom_call.1} parent=1 // pred_region
      %1422 = dma.done [#allocation3], 128
    $region61: #{tpu_custom_call.1} parent=1 // pred_fallthru
      _
    %1423 = vsyncpa [#allocation3], 1

</llo_original>
